<compile_context>
chip_gen: v6e
topology: v6e:2x2x1
jax: 0.10.0
libtpu: 0.0.40
codegen_flags: <defaults>
</compile_context>

<pallas_src>
from math import pi

import jax
import jax.numpy as jnp
from jax.experimental import pallas as pl
from jax.experimental.pallas import tpu as pltpu

# ------------------------- small but structurally faithful sizes -------------------------
B = 2              # batch
C_IN = 2           # audio channels (stereo)
T = 128            # audio length
PATCH = 4          # patch_size
TP = T // PATCH    # patched length (32)
F_IN = C_IN * PATCH
CH = 32            # unet channels
EMB_F = 32         # embedding_features
EMB_L = 8          # embedding_max_length
HEADS = 4          # attention_heads
DH = CH // HEADS   # attention_features per head
NR = B * TP        # stacked activation rows (64)
NK = B * HEADS * EMB_L   # stacked (batch, head, key) score columns (64)
N_FREQ = 16        # learned fourier frequencies for sigma embedding
MASK_PROBA = 0.1   # embedding_mask_proba

# ---- per-row data slab (CH lanes wide) row offsets ----
XP_OFF = 0 * NR            # patchified x               (NR, F_IN) padded to CH lanes
NP_OFF = 1 * NR            # patchified noise
AA_OFF = 2 * NR            # alpha, broadcast to F_IN
BB_OFF = 3 * NR            # beta,  broadcast to F_IN
SC_OFF = 4 * NR            # FiLM (1 + scale) per row   (NR, CH)
SH_OFF = 5 * NR            # FiLM shift per row
D_ROWS = 6 * NR            # 384

# ---- weight slab (CH lanes wide) row offsets (all 8-aligned) ----
PW_OFF = 0                 # patch_w   (F_IN, CH)
PB_OFF = PW_OFF + F_IN     # patch_b   (1, CH)  [padded to 8 rows]
W1_OFF = PB_OFF + 8        # conv1 im2col [tap-1; tap0; tap+1]  (3*CH, CH)
B1_OFF = W1_OFF + 3 * CH
W2_OFF = B1_OFF + 8
B2_OFF = W2_OFF + 3 * CH
WQ_OFF = B2_OFF + 8        # wq * 1/sqrt(DH)   (CH, CH)
WK_OFF = WQ_OFF + CH       # wk^T              (CH, EMB_F)
WV_OFF = WK_OFF + CH       # wv                (EMB_F, CH)
WO_OFF = WV_OFF + CH       # wo                (CH, CH)
UW_OFF = WO_OFF + CH       # unpatch_w         (CH, F_IN) padded to CH lanes
UB_OFF = UW_OFF + CH       # unpatch_b         (1, F_IN)  padded
W_ROWS = UB_OFF + 8        # 392

# ---- constant / embedding slab (NK lanes wide) row offsets ----
ETR_OFF = 0                # e_t_rep   (CH, NK)   head-replicated embedding, transposed
MHD_OFF = ETR_OFF + CH     # mask_hd   (CH, NK)   block-diagonal head mask for K slab
XM_OFF = MHD_OFF + CH      # xmask     (NR, NK)   0 same-batch / -1e9 cross-batch (additive)
GS_OFF = XM_OFF + NR       # gsum      (NK, NK)   per-(batch,head) group-sum matrix
SP_OFF = GS_OFF + NK       # sprev     (NR, NR)   shift(+1) matrix, batch-boundary zeroed
SN_OFF = SP_OFF + NR       # snext     (NR, NR)   shift(-1) matrix, batch-boundary zeroed
ER_OFF = SN_OFF + NR       # e_rep     (NK, EMB_F) head-replicated embedding (lane-padded)
MV_OFF = ER_OFF + NK       # mask_v    (NK, CH)    block-diagonal head mask for V slab
C_ROWS = MV_OFF + NK       # 448


# ===================================== fused Pallas kernel =====================================

def _fused_vdiff_kernel(d_ref, w_ref, c_ref, out_ref):
    """Whole forward (both batch rows stacked): vmix -> patch dense -> conv/FiLM/SiLU ->
    conv+res -> multi-head cross-attn -> unpatch -> total SSE."""
    f32 = jnp.float32

    # ---------------- v-diffusion noising (pure VPU, patchified layout) ----------------
    x = d_ref[XP_OFF:XP_OFF + NR, 0:F_IN]
    n = d_ref[NP_OFF:NP_OFF + NR, 0:F_IN]
    a = d_ref[AA_OFF:AA_OFF + NR, 0:F_IN]
    b = d_ref[BB_OFF:BB_OFF + NR, 0:F_IN]
    x_noisy = a * x + b * n
    v_target = a * n - b * x

    # ---------------- patch embedding dense ----------------
    h = (jnp.dot(x_noisy, w_ref[PW_OFF:PW_OFF + F_IN, :], preferred_element_type=f32)
         + w_ref[PB_OFF:PB_OFF + 1, :])                                   # (NR, CH)

    # ---------------- resnet block: conv3 -> FiLM(time) -> SiLU -> conv3 -> +res ----------------
    # k=3 conv along time via constant shift matrices on the (idle) MXU; the per-batch zero
    # boundaries are baked into sprev/snext, so no halo scratch, rolls or boundary masks.
    sprev = c_ref[SP_OFF:SP_OFF + NR, :]                                  # (NR, NR)
    snext = c_ref[SN_OFF:SN_OFF + NR, :]

    def conv3(u, w_off, b_off):
        t0 = jnp.dot(u, w_ref[w_off:w_off + CH, :], preferred_element_type=f32)
        t1 = jnp.dot(u, w_ref[w_off + CH:w_off + 2 * CH, :], preferred_element_type=f32)
        t2 = jnp.dot(u, w_ref[w_off + 2 * CH:w_off + 3 * CH, :], preferred_element_type=f32)
        return (jnp.dot(sprev, t0, preferred_element_type=f32)
                + t1
                + jnp.dot(snext, t2, preferred_element_type=f32)
                + w_ref[b_off:b_off + 1, :])

    y = conv3(h, W1_OFF, B1_OFF)
    y = y * d_ref[SC_OFF:SC_OFF + NR, :] + d_ref[SH_OFF:SH_OFF + NR, :]   # FiLM ((1+scale) pre-folded)
    y = y * jax.nn.sigmoid(y)                                             # SiLU
    h = conv3(y, W2_OFF, B2_OFF) + h                                      # residual

    # ---------------- multi-head cross-attention over text embedding ----------------
    # Block-diagonal K/V slabs over the stacked batch: every head/batch score and output comes
    # from one well-shaped matmul. 1/sqrt(DH) is folded into wq.
    q = jnp.dot(h, w_ref[WQ_OFF:WQ_OFF + CH, :], preferred_element_type=f32)     # (NR, CH)
    k_big = (jnp.dot(w_ref[WK_OFF:WK_OFF + CH, :], c_ref[ETR_OFF:ETR_OFF + CH, :],
                     preferred_element_type=f32)
             * c_ref[MHD_OFF:MHD_OFF + CH, :])                                   # (CH, NK)

    s = jnp.dot(q, k_big, preferred_element_type=f32) + c_ref[XM_OFF:XM_OFF + NR, :]
    # Row max is within-batch thanks to the additive mask; shift-invariant per head.
    s = s - jnp.max(s, axis=-1, keepdims=True)
    p = jnp.exp(s)
    denom = jnp.dot(p, c_ref[GS_OFF:GS_OFF + NK, :], preferred_element_type=f32)  # per-(batch,head) sums
    # Clamped denominator: a fully-underflowed head degrades to a zero output instead of NaN
    # (exact per-head softmax whenever no head underflows, which holds for these scales).
    p = p / jnp.maximum(denom, 1e-30)

    v_big = (jnp.dot(c_ref[ER_OFF:ER_OFF + NK, 0:CH], w_ref[WV_OFF:WV_OFF + CH, :],
                     preferred_element_type=f32)
             * c_ref[MV_OFF:MV_OFF + NK, 0:CH])                                  # (NK, CH)
    o = jnp.dot(p, v_big, preferred_element_type=f32)                            # (NR, CH)
    h = h + jnp.dot(o, w_ref[WO_OFF:WO_OFF + CH, :], preferred_element_type=f32)

    # ---------------- unpatch dense + fused SSE against v_target ----------------
    v_pred = (jnp.dot(h, w_ref[UW_OFF:UW_OFF + CH, :], preferred_element_type=f32)
              + w_ref[UB_OFF:UB_OFF + 1, :])[:, 0:F_IN]
    d = v_pred - v_target
    out_ref[...] = jnp.broadcast_to(jnp.sum(d * d), (8, 128))             # lane-dense, unmasked store


def fused_vdiffusion_sse(dslab, wslab, cslab):
    """Single-step pallas_call for the whole forward; returns an (8, 128) tile holding total SSE."""
    return pl.pallas_call(
        _fused_vdiff_kernel,
        grid=(1,),
        in_specs=[
            pl.BlockSpec((D_ROWS, CH), lambda i: (0, 0)),   # per-row data slab
            pl.BlockSpec((W_ROWS, CH), lambda i: (0, 0)),   # packed weights slab
            pl.BlockSpec((C_ROWS, NK), lambda i: (0, 0)),   # constants + replicated embedding slab
        ],
        out_specs=pl.BlockSpec((8, 128), lambda i: (0, 0)),
        out_shape=jax.ShapeDtypeStruct((8, 128), jnp.float32),
        compiler_params=pltpu.CompilerParams(dimension_semantics=("arbitrary",)),
    )(dslab, wslab, cslab)


# ====================================== model glue ========================================

def init_params(key):
    ks = jax.random.split(key, 16)
    s = 0.02
    return {
        "patch_w": jax.random.normal(ks[0], (F_IN, CH), jnp.float32) * s,
        "patch_b": jnp.zeros((CH,), jnp.float32),
        "time_freqs": jax.random.normal(ks[1], (N_FREQ,), jnp.float32),
        "time_w1": jax.random.normal(ks[2], (2 * N_FREQ + 1, CH), jnp.float32) * s,
        "time_b1": jnp.zeros((CH,), jnp.float32),
        "time_w2": jax.random.normal(ks[3], (CH, 2 * CH), jnp.float32) * s,
        "time_b2": jnp.zeros((2 * CH,), jnp.float32),
        "conv_w1": jax.random.normal(ks[4], (3, CH, CH), jnp.float32) * s,
        "conv_b1": jnp.zeros((CH,), jnp.float32),
        "conv_w2": jax.random.normal(ks[5], (3, CH, CH), jnp.float32) * s,
        "conv_b2": jnp.zeros((CH,), jnp.float32),
        "attn_wq": jax.random.normal(ks[6], (CH, CH), jnp.float32) * s,
        "attn_wk": jax.random.normal(ks[7], (EMB_F, CH), jnp.float32) * s,
        "attn_wv": jax.random.normal(ks[8], (EMB_F, CH), jnp.float32) * s,
        "attn_wo": jax.random.normal(ks[9], (CH, CH), jnp.float32) * s,
        "unpatch_w": jax.random.normal(ks[10], (CH, F_IN), jnp.float32) * s,
        "unpatch_b": jnp.zeros((F_IN,), jnp.float32),
        "fixed_embedding": jax.random.normal(ks[11], (EMB_L, EMB_F), jnp.float32) * s,
    }


def _patchify_rows(u):
    # NCL -> stacked patch rows (B*TP, C_IN*PATCH): pure layout glue
    return u.reshape(B, C_IN, TP, PATCH).transpose(0, 2, 1, 3).reshape(NR, F_IN)


def _time_film(sigmas, params):
    # sigma -> learned fourier features -> tiny MLP -> (B, 2, CH) FiLM scale/shift (wrapper glue)
    ang = sigmas[:, None] * params["time_freqs"][None, :] * (2.0 * pi)
    four = jnp.concatenate([sigmas[:, None], jnp.sin(ang), jnp.cos(ang)], axis=-1)  # (B, 2F+1)
    t = four @ params["time_w1"] + params["time_b1"]
    t = t * jax.nn.sigmoid(t)                                                       # SiLU
    ss = t @ params["time_w2"] + params["time_b2"]                                  # (B, 2CH)
    return jnp.stack([ss[:, :CH], ss[:, CH:]], axis=1)                              # (B, 2, CH)


def _pack_row_data(x, noise, alpha, beta, sigmas, params):
    xp = _patchify_rows(x)
    np_ = _patchify_rows(noise)
    a8 = jnp.broadcast_to(jnp.repeat(alpha, TP)[:, None], (NR, F_IN))
    b8 = jnp.broadcast_to(jnp.repeat(beta, TP)[:, None], (NR, F_IN))
    d8 = jnp.concatenate([xp, np_, a8, b8], axis=0)                       # (4*NR, F_IN)
    d8 = jnp.pad(d8, ((0, 0), (0, CH - F_IN)))                            # pad lanes to CH

    film = _time_film(sigmas, params)                                     # (B, 2, CH)
    scale1p = jnp.repeat(1.0 + film[:, 0, :], TP, axis=0)                 # (NR, CH), (1+scale) folded
    shift = jnp.repeat(film[:, 1, :], TP, axis=0)                         # (NR, CH)
    return jnp.concatenate([d8, scale1p, shift], axis=0)                  # (D_ROWS, CH)


def _pack_weights(params):
    pad7 = jnp.zeros((7, CH), jnp.float32)
    w1col = params["conv_w1"].reshape(3 * CH, CH)
    w2col = params["conv_w2"].reshape(3 * CH, CH)
    wq_s = params["attn_wq"] * (1.0 / (DH ** 0.5))                        # fold attention scale
    wk_t = params["attn_wk"].T
    uw = jnp.pad(params["unpatch_w"], ((0, 0), (0, CH - F_IN)))
    ub = jnp.pad(params["unpatch_b"].reshape(1, F_IN), ((0, 0), (0, CH - F_IN)))
    return jnp.concatenate([
        params["patch_w"],
        params["patch_b"].reshape(1, CH), pad7,
        w1col,
        params["conv_b1"].reshape(1, CH), pad7,
        w2col,
        params["conv_b2"].reshape(1, CH), pad7,
        wq_s, wk_t, params["attn_wv"], params["attn_wo"],
        uw,
        ub, pad7,
    ], axis=0)                                                            # (W_ROWS, CH)


def _pack_consts_and_embedding(emb):
    f32 = jnp.float32
    # head-replicated embedding: row/col index = b*(HEADS*EMB_L) + h*EMB_L + l
    e_rep = jnp.tile(emb, (1, HEADS, 1)).reshape(NK, EMB_F)               # (NK, EMB_F)
    e_t_rep = e_rep.T                                                     # (EMB_F, NK)

    ch = jnp.arange(CH)
    col = jnp.arange(NK)
    ri = jnp.arange(NR)
    head_of_col = (col // EMB_L) % HEADS
    mask_hd = ((ch[:, None] // DH) == head_of_col[None, :]).astype(f32)   # (CH, NK)
    mask_v = (head_of_col[:, None] == (ch[None, :] // DH)).astype(f32)    # (NK, CH)
    xmask = jnp.where((ri[:, None] // TP) == (col[None, :] // (HEADS * EMB_L)),
                      0.0, -1e9).astype(f32)                              # (NR, NK)
    gsum = ((col[:, None] // EMB_L) == (col[None, :] // EMB_L)).astype(f32)  # (NK, NK)
    # conv shift matrices with per-batch zero boundaries baked in
    sprev = ((ri[:, None] - 1 == ri[None, :]) & ((ri % TP) != 0)[:, None]).astype(f32)
    snext = ((ri[:, None] + 1 == ri[None, :]) & ((ri % TP) != TP - 1)[:, None]).astype(f32)

    pad_to_nk = lambda m: jnp.pad(m, ((0, 0), (0, NK - m.shape[1])))
    return jnp.concatenate([
        e_t_rep,           # ETR_OFF
        mask_hd,           # MHD_OFF
        xmask,             # XM_OFF
        gsum,              # GS_OFF
        sprev,             # SP_OFF
        snext,             # SN_OFF
        pad_to_nk(e_rep),  # ER_OFF
        pad_to_nk(mask_v), # MV_OFF
    ], axis=0)                                                            # (C_ROWS, NK)


def audio_diffusion_conditional_forward(x, embedding, params, key):
    """AudioDiffusionConditional.forward(x, embedding=...) -> scalar v-diffusion MSE loss."""
    k_sig, k_noise, k_mask = jax.random.split(key, 3)
    sigmas = jax.random.uniform(k_sig, (B,), dtype=jnp.float32)           # UniformDistribution()
    noise = jax.random.normal(k_noise, x.shape, dtype=jnp.float32)
    # CFG: replace embedding with learned fixed embedding with prob embedding_mask_proba
    drop = jax.random.uniform(k_mask, (B,)) < MASK_PROBA
    emb = jnp.where(drop[:, None, None], params["fixed_embedding"][None], embedding)

    alpha = jnp.cos(sigmas * (pi / 2.0))
    beta = jnp.sin(sigmas * (pi / 2.0))

    dslab = _pack_row_data(x, noise, alpha, beta, sigmas, params)         # per-call row data
    wslab = _pack_weights(params)                                         # packed parameters
    cslab = _pack_consts_and_embedding(emb)                               # constants + embedding

    # single fused Pallas kernel: vmix + unet + total SSE (MSE is permutation-invariant, so the
    # patchified-layout SSE equals the NCL-layout SSE exactly)
    sse = fused_vdiffusion_sse(dslab, wslab, cslab)                       # (8, 128)
    return sse[0, 0] / float(B * C_IN * T)


if __name__ == "__main__":
    root = jax.random.PRNGKey(0)
    k_x, k_emb, k_params, k_fwd = jax.random.split(root, 4)

    x = jax.random.normal(k_x, (B, C_IN, T), jnp.float32)                 # audio, NCL
    embedding = jax.random.normal(k_emb, (B, EMB_L, EMB_F), jnp.float32)
    params = init_params(k_params)

    loss = jax.jit(audio_diffusion_conditional_forward)(x, embedding, params, k_fwd)
    loss = jax.block_until_ready(loss)
    assert bool(jnp.isfinite(loss))
    print("KERNEL_OK")
</pallas_src>

<mosaic_0001>
module attributes {stable_mosaic.version = 11 : i64} {
  func.func @_fused_vdiff_kernel(%arg0: i32, %arg1: memref<384x32xf32, #tpu.memory_space<vmem>>, %arg2: memref<392x32xf32, #tpu.memory_space<vmem>>, %arg3: memref<448x64xf32, #tpu.memory_space<vmem>>, %arg4: memref<8x128xf32, #tpu.memory_space<vmem>>) attributes {dimension_semantics = [#tpu.dimension_semantics<arbitrary>], iteration_bounds = array<i64: 1>, scalar_prefetch = 0 : i64, scratch_operands = 0 : i64, tpu.core_type = #tpu.core_type<tc>, window_params = [{pipeline_mode = #tpu.pipeline_mode<synchronous>, transform_indices = @transform_0, window_bounds = array<i64: 384, 32>}, {pipeline_mode = #tpu.pipeline_mode<synchronous>, transform_indices = @transform_1, window_bounds = array<i64: 392, 32>}, {pipeline_mode = #tpu.pipeline_mode<synchronous>, transform_indices = @transform_2, window_bounds = array<i64: 448, 64>}, {pipeline_mode = #tpu.pipeline_mode<synchronous>, transform_indices = @transform_3, window_bounds = array<i64: 8, 128>}]} {
    %c0 = arith.constant 0 : index
    %c0_0 = arith.constant 0 : index
    %0 = vector.load %arg1[%c0, %c0_0] : memref<384x32xf32, #tpu.memory_space<vmem>>, vector<64x8xf32>
    %c64 = arith.constant 64 : index
    %c0_1 = arith.constant 0 : index
    %1 = vector.load %arg1[%c64, %c0_1] : memref<384x32xf32, #tpu.memory_space<vmem>>, vector<64x8xf32>
    %c128 = arith.constant 128 : index
    %c0_2 = arith.constant 0 : index
    %2 = vector.load %arg1[%c128, %c0_2] : memref<384x32xf32, #tpu.memory_space<vmem>>, vector<64x8xf32>
    %c192 = arith.constant 192 : index
    %c0_3 = arith.constant 0 : index
    %3 = vector.load %arg1[%c192, %c0_3] : memref<384x32xf32, #tpu.memory_space<vmem>>, vector<64x8xf32>
    %4 = arith.mulf %2, %0 : vector<64x8xf32>
    %5 = arith.mulf %3, %1 : vector<64x8xf32>
    %6 = arith.addf %4, %5 : vector<64x8xf32>
    %7 = arith.mulf %2, %1 : vector<64x8xf32>
    %8 = arith.mulf %3, %0 : vector<64x8xf32>
    %9 = arith.subf %7, %8 : vector<64x8xf32>
    %c0_4 = arith.constant 0 : index
    %c0_5 = arith.constant 0 : index
    %10 = vector.load %arg2[%c0_4, %c0_5] : memref<392x32xf32, #tpu.memory_space<vmem>>, vector<8x32xf32>
    %cst = arith.constant dense<0.000000e+00> : vector<64x32xf32>
    %11 = tpu.matmul %6, %10, %cst {dimension_numbers = #tpu.dot_dimension_numbers<[1], [0], [0], [1], [0, 0, 1, 1], [], []>} : vector<64x8xf32>, vector<8x32xf32>, vector<64x32xf32> -> vector<64x32xf32>
    %c8 = arith.constant 8 : index
    %c0_6 = arith.constant 0 : index
    %12 = vector.load %arg2[%c8, %c0_6] : memref<392x32xf32, #tpu.memory_space<vmem>>, vector<1x32xf32>
    %13 = vector.broadcast %12 : vector<1x32xf32> to vector<64x32xf32>
    %14 = arith.addf %11, %13 : vector<64x32xf32>
    %c192_7 = arith.constant 192 : index
    %c0_8 = arith.constant 0 : index
    %15 = vector.load %arg3[%c192_7, %c0_8] : memref<448x64xf32, #tpu.memory_space<vmem>>, vector<64x64xf32>
    %c256 = arith.constant 256 : index
    %c0_9 = arith.constant 0 : index
    %16 = vector.load %arg3[%c256, %c0_9] : memref<448x64xf32, #tpu.memory_space<vmem>>, vector<64x64xf32>
    %c16 = arith.constant 16 : index
    %c0_10 = arith.constant 0 : index
    %17 = vector.load %arg2[%c16, %c0_10] : memref<392x32xf32, #tpu.memory_space<vmem>>, vector<32x32xf32>
    %cst_11 = arith.constant dense<0.000000e+00> : vector<64x32xf32>
    %18 = tpu.matmul %14, %17, %cst_11 {dimension_numbers = #tpu.dot_dimension_numbers<[1], [0], [0], [1], [0, 0, 1, 1], [], []>} : vector<64x32xf32>, vector<32x32xf32>, vector<64x32xf32> -> vector<64x32xf32>
    %c48 = arith.constant 48 : index
    %c0_12 = arith.constant 0 : index
    %19 = vector.load %arg2[%c48, %c0_12] : memref<392x32xf32, #tpu.memory_space<vmem>>, vector<32x32xf32>
    %cst_13 = arith.constant dense<0.000000e+00> : vector<64x32xf32>
    %20 = tpu.matmul %14, %19, %cst_13 {dimension_numbers = #tpu.dot_dimension_numbers<[1], [0], [0], [1], [0, 0, 1, 1], [], []>} : vector<64x32xf32>, vector<32x32xf32>, vector<64x32xf32> -> vector<64x32xf32>
    %c80 = arith.constant 80 : index
    %c0_14 = arith.constant 0 : index
    %21 = vector.load %arg2[%c80, %c0_14] : memref<392x32xf32, #tpu.memory_space<vmem>>, vector<32x32xf32>
    %cst_15 = arith.constant dense<0.000000e+00> : vector<64x32xf32>
    %22 = tpu.matmul %14, %21, %cst_15 {dimension_numbers = #tpu.dot_dimension_numbers<[1], [0], [0], [1], [0, 0, 1, 1], [], []>} : vector<64x32xf32>, vector<32x32xf32>, vector<64x32xf32> -> vector<64x32xf32>
    %cst_16 = arith.constant dense<0.000000e+00> : vector<64x32xf32>
    %23 = tpu.matmul %15, %18, %cst_16 {dimension_numbers = #tpu.dot_dimension_numbers<[1], [0], [0], [1], [0, 0, 1, 1], [], []>} : vector<64x64xf32>, vector<64x32xf32>, vector<64x32xf32> -> vector<64x32xf32>
    %24 = arith.addf %23, %20 : vector<64x32xf32>
    %cst_17 = arith.constant dense<0.000000e+00> : vector<64x32xf32>
    %25 = tpu.matmul %16, %22, %cst_17 {dimension_numbers = #tpu.dot_dimension_numbers<[1], [0], [0], [1], [0, 0, 1, 1], [], []>} : vector<64x64xf32>, vector<64x32xf32>, vector<64x32xf32> -> vector<64x32xf32>
    %26 = arith.addf %24, %25 : vector<64x32xf32>
    %c112 = arith.constant 112 : index
    %c0_18 = arith.constant 0 : index
    %27 = vector.load %arg2[%c112, %c0_18] : memref<392x32xf32, #tpu.memory_space<vmem>>, vector<1x32xf32>
    %28 = vector.broadcast %27 : vector<1x32xf32> to vector<64x32xf32>
    %29 = arith.addf %26, %28 : vector<64x32xf32>
    %c256_19 = arith.constant 256 : index
    %c0_20 = arith.constant 0 : index
    %30 = vector.load %arg1[%c256_19, %c0_20] : memref<384x32xf32, #tpu.memory_space<vmem>>, vector<64x32xf32>
    %31 = arith.mulf %29, %30 : vector<64x32xf32>
    %c320 = arith.constant 320 : index
    %c0_21 = arith.constant 0 : index
    %32 = vector.load %arg1[%c320, %c0_21] : memref<384x32xf32, #tpu.memory_space<vmem>>, vector<64x32xf32>
    %33 = arith.addf %31, %32 : vector<64x32xf32>
    %34 = arith.negf %33 : vector<64x32xf32>
    %35 = math.exp %34 : vector<64x32xf32>
    %cst_22 = arith.constant 1.000000e+00 : f32
    %36 = vector.broadcast %cst_22 : f32 to vector<64x32xf32>
    %37 = arith.addf %36, %35 : vector<64x32xf32>
    %38 = arith.divf %36, %37 : vector<64x32xf32>
    %39 = arith.mulf %33, %38 : vector<64x32xf32>
    %c120 = arith.constant 120 : index
    %c0_23 = arith.constant 0 : index
    %40 = vector.load %arg2[%c120, %c0_23] : memref<392x32xf32, #tpu.memory_space<vmem>>, vector<32x32xf32>
    %cst_24 = arith.constant dense<0.000000e+00> : vector<64x32xf32>
    %41 = tpu.matmul %39, %40, %cst_24 {dimension_numbers = #tpu.dot_dimension_numbers<[1], [0], [0], [1], [0, 0, 1, 1], [], []>} : vector<64x32xf32>, vector<32x32xf32>, vector<64x32xf32> -> vector<64x32xf32>
    %c152 = arith.constant 152 : index
    %c0_25 = arith.constant 0 : index
    %42 = vector.load %arg2[%c152, %c0_25] : memref<392x32xf32, #tpu.memory_space<vmem>>, vector<32x32xf32>
    %cst_26 = arith.constant dense<0.000000e+00> : vector<64x32xf32>
    %43 = tpu.matmul %39, %42, %cst_26 {dimension_numbers = #tpu.dot_dimension_numbers<[1], [0], [0], [1], [0, 0, 1, 1], [], []>} : vector<64x32xf32>, vector<32x32xf32>, vector<64x32xf32> -> vector<64x32xf32>
    %c184 = arith.constant 184 : index
    %c0_27 = arith.constant 0 : index
    %44 = vector.load %arg2[%c184, %c0_27] : memref<392x32xf32, #tpu.memory_space<vmem>>, vector<32x32xf32>
    %cst_28 = arith.constant dense<0.000000e+00> : vector<64x32xf32>
    %45 = tpu.matmul %39, %44, %cst_28 {dimension_numbers = #tpu.dot_dimension_numbers<[1], [0], [0], [1], [0, 0, 1, 1], [], []>} : vector<64x32xf32>, vector<32x32xf32>, vector<64x32xf32> -> vector<64x32xf32>
    %cst_29 = arith.constant dense<0.000000e+00> : vector<64x32xf32>
    %46 = tpu.matmul %15, %41, %cst_29 {dimension_numbers = #tpu.dot_dimension_numbers<[1], [0], [0], [1], [0, 0, 1, 1], [], []>} : vector<64x64xf32>, vector<64x32xf32>, vector<64x32xf32> -> vector<64x32xf32>
    %47 = arith.addf %46, %43 : vector<64x32xf32>
    %cst_30 = arith.constant dense<0.000000e+00> : vector<64x32xf32>
    %48 = tpu.matmul %16, %45, %cst_30 {dimension_numbers = #tpu.dot_dimension_numbers<[1], [0], [0], [1], [0, 0, 1, 1], [], []>} : vector<64x64xf32>, vector<64x32xf32>, vector<64x32xf32> -> vector<64x32xf32>
    %49 = arith.addf %47, %48 : vector<64x32xf32>
    %c216 = arith.constant 216 : index
    %c0_31 = arith.constant 0 : index
    %50 = vector.load %arg2[%c216, %c0_31] : memref<392x32xf32, #tpu.memory_space<vmem>>, vector<1x32xf32>
    %51 = vector.broadcast %50 : vector<1x32xf32> to vector<64x32xf32>
    %52 = arith.addf %49, %51 : vector<64x32xf32>
    %53 = arith.addf %52, %14 : vector<64x32xf32>
    %c224 = arith.constant 224 : index
    %c0_32 = arith.constant 0 : index
    %54 = vector.load %arg2[%c224, %c0_32] : memref<392x32xf32, #tpu.memory_space<vmem>>, vector<32x32xf32>
    %cst_33 = arith.constant dense<0.000000e+00> : vector<64x32xf32>
    %55 = tpu.matmul %53, %54, %cst_33 {dimension_numbers = #tpu.dot_dimension_numbers<[1], [0], [0], [1], [0, 0, 1, 1], [], []>} : vector<64x32xf32>, vector<32x32xf32>, vector<64x32xf32> -> vector<64x32xf32>
    %c256_34 = arith.constant 256 : index
    %c0_35 = arith.constant 0 : index
    %56 = vector.load %arg2[%c256_34, %c0_35] : memref<392x32xf32, #tpu.memory_space<vmem>>, vector<32x32xf32>
    %c0_36 = arith.constant 0 : index
    %c0_37 = arith.constant 0 : index
    %57 = vector.load %arg3[%c0_36, %c0_37] : memref<448x64xf32, #tpu.memory_space<vmem>>, vector<32x64xf32>
    %cst_38 = arith.constant dense<0.000000e+00> : vector<32x64xf32>
    %58 = tpu.matmul %56, %57, %cst_38 {dimension_numbers = #tpu.dot_dimension_numbers<[1], [0], [0], [1], [0, 0, 1, 1], [], []>} : vector<32x32xf32>, vector<32x64xf32>, vector<32x64xf32> -> vector<32x64xf32>
    %c32 = arith.constant 32 : index
    %c0_39 = arith.constant 0 : index
    %59 = vector.load %arg3[%c32, %c0_39] : memref<448x64xf32, #tpu.memory_space<vmem>>, vector<32x64xf32>
    %60 = arith.mulf %58, %59 : vector<32x64xf32>
    %cst_40 = arith.constant dense<0.000000e+00> : vector<64x64xf32>
    %61 = tpu.matmul %55, %60, %cst_40 {dimension_numbers = #tpu.dot_dimension_numbers<[1], [0], [0], [1], [0, 0, 1, 1], [], []>} : vector<64x32xf32>, vector<32x64xf32>, vector<64x64xf32> -> vector<64x64xf32>
    %c64_41 = arith.constant 64 : index
    %c0_42 = arith.constant 0 : index
    %62 = vector.load %arg3[%c64_41, %c0_42] : memref<448x64xf32, #tpu.memory_space<vmem>>, vector<64x64xf32>
    %63 = arith.addf %61, %62 : vector<64x64xf32>
    %cst_43 = arith.constant dense<0xFF800000> : vector<64xf32>
    %64 = vector.multi_reduction <maximumf>, %63, %cst_43 [1] : vector<64x64xf32> to vector<64xf32>
    %65 = vector.shape_cast %64 : vector<64xf32> to vector<64x1xf32>
    %66 = vector.broadcast %65 : vector<64x1xf32> to vector<64x64xf32>
    %67 = arith.subf %63, %66 : vector<64x64xf32>
    %68 = math.exp %67 : vector<64x64xf32>
    %c128_44 = arith.constant 128 : index
    %c0_45 = arith.constant 0 : index
    %69 = vector.load %arg3[%c128_44, %c0_45] : memref<448x64xf32, #tpu.memory_space<vmem>>, vector<64x64xf32>
    %cst_46 = arith.constant dense<0.000000e+00> : vector<64x64xf32>
    %70 = tpu.matmul %68, %69, %cst_46 {dimension_numbers = #tpu.dot_dimension_numbers<[1], [0], [0], [1], [0, 0, 1, 1], [], []>} : vector<64x64xf32>, vector<64x64xf32>, vector<64x64xf32> -> vector<64x64xf32>
    %cst_47 = arith.constant 1.000000e-30 : f32
    %71 = vector.broadcast %cst_47 : f32 to vector<64x64xf32>
    %72 = arith.maximumf %70, %71 : vector<64x64xf32>
    %73 = arith.divf %68, %72 : vector<64x64xf32>
    %c320_48 = arith.constant 320 : index
    %c0_49 = arith.constant 0 : index
    %74 = vector.load %arg3[%c320_48, %c0_49] : memref<448x64xf32, #tpu.memory_space<vmem>>, vector<64x32xf32>
    %c288 = arith.constant 288 : index
    %c0_50 = arith.constant 0 : index
    %75 = vector.load %arg2[%c288, %c0_50] : memref<392x32xf32, #tpu.memory_space<vmem>>, vector<32x32xf32>
    %cst_51 = arith.constant dense<0.000000e+00> : vector<64x32xf32>
    %76 = tpu.matmul %74, %75, %cst_51 {dimension_numbers = #tpu.dot_dimension_numbers<[1], [0], [0], [1], [0, 0, 1, 1], [], []>} : vector<64x32xf32>, vector<32x32xf32>, vector<64x32xf32> -> vector<64x32xf32>
    %c384 = arith.constant 384 : index
    %c0_52 = arith.constant 0 : index
    %77 = vector.load %arg3[%c384, %c0_52] : memref<448x64xf32, #tpu.memory_space<vmem>>, vector<64x32xf32>
    %78 = arith.mulf %76, %77 : vector<64x32xf32>
    %cst_53 = arith.constant dense<0.000000e+00> : vector<64x32xf32>
    %79 = tpu.matmul %73, %78, %cst_53 {dimension_numbers = #tpu.dot_dimension_numbers<[1], [0], [0], [1], [0, 0, 1, 1], [], []>} : vector<64x64xf32>, vector<64x32xf32>, vector<64x32xf32> -> vector<64x32xf32>
    %c320_54 = arith.constant 320 : index
    %c0_55 = arith.constant 0 : index
    %80 = vector.load %arg2[%c320_54, %c0_55] : memref<392x32xf32, #tpu.memory_space<vmem>>, vector<32x32xf32>
    %cst_56 = arith.constant dense<0.000000e+00> : vector<64x32xf32>
    %81 = tpu.matmul %79, %80, %cst_56 {dimension_numbers = #tpu.dot_dimension_numbers<[1], [0], [0], [1], [0, 0, 1, 1], [], []>} : vector<64x32xf32>, vector<32x32xf32>, vector<64x32xf32> -> vector<64x32xf32>
    %82 = arith.addf %53, %81 : vector<64x32xf32>
    %c352 = arith.constant 352 : index
    %c0_57 = arith.constant 0 : index
    %83 = vector.load %arg2[%c352, %c0_57] : memref<392x32xf32, #tpu.memory_space<vmem>>, vector<32x32xf32>
    %cst_58 = arith.constant dense<0.000000e+00> : vector<64x32xf32>
    %84 = tpu.matmul %82, %83, %cst_58 {dimension_numbers = #tpu.dot_dimension_numbers<[1], [0], [0], [1], [0, 0, 1, 1], [], []>} : vector<64x32xf32>, vector<32x32xf32>, vector<64x32xf32> -> vector<64x32xf32>
    %c384_59 = arith.constant 384 : index
    %c0_60 = arith.constant 0 : index
    %85 = vector.load %arg2[%c384_59, %c0_60] : memref<392x32xf32, #tpu.memory_space<vmem>>, vector<1x32xf32>
    %86 = vector.broadcast %85 : vector<1x32xf32> to vector<64x32xf32>
    %87 = arith.addf %84, %86 : vector<64x32xf32>
    %88 = vector.extract_strided_slice %87 {offsets = [0, 0], sizes = [64, 8], strides = [1, 1]} : vector<64x32xf32> to vector<64x8xf32>
    %89 = arith.subf %88, %9 : vector<64x8xf32>
    %90 = arith.mulf %89, %89 : vector<64x8xf32>
    %91 = vector.shape_cast %90 : vector<64x8xf32> to vector<1x64x8xf32>
    %cst_61 = arith.constant dense<0.000000e+00> : vector<1xf32>
    %92 = vector.multi_reduction <add>, %91, %cst_61 [1, 2] : vector<1x64x8xf32> to vector<1xf32>
    %93 = vector.shape_cast %92 : vector<1xf32> to vector<1x1x1xf32>
    %94 = vector.extract %93[0, 0, 0] : f32 from vector<1x1x1xf32>
    %95 = vector.broadcast %94 : f32 to vector<8x128xf32>
    %c0_62 = arith.constant 0 : index
    %c0_63 = arith.constant 0 : index
    %96 = vector.load %arg4[%c0_62, %c0_63] : memref<8x128xf32, #tpu.memory_space<vmem>>, vector<8x128xf32>
    tpu.vector_store %arg4[%c0_62, %c0_63], %95 {strides = array<i32>} : memref<8x128xf32, #tpu.memory_space<vmem>>, vector<8x128xf32>,
    return
  }
  func.func @transform_0(%arg0: i32) -> (i32, i32) {
    %c0_i32 = arith.constant 0 : i32
    %c0_i32_0 = arith.constant 0 : i32
    %c0_i32_1 = arith.constant 0 : i32
    return %c0_i32, %c0_i32_0 : i32, i32
  }
  func.func @transform_1(%arg0: i32) -> (i32, i32) {
    %c0_i32 = arith.constant 0 : i32
    %c0_i32_0 = arith.constant 0 : i32
    %c0_i32_1 = arith.constant 0 : i32
    return %c0_i32, %c0_i32_0 : i32, i32
  }
  func.func @transform_2(%arg0: i32) -> (i32, i32) {
    %c0_i32 = arith.constant 0 : i32
    %c0_i32_0 = arith.constant 0 : i32
    %c0_i32_1 = arith.constant 0 : i32
    return %c0_i32, %c0_i32_0 : i32, i32
  }
  func.func @transform_3(%arg0: i32) -> (i32, i32) {
    %c0_i32 = arith.constant 0 : i32
    %c0_i32_0 = arith.constant 0 : i32
    %c0_i32_1 = arith.constant 0 : i32
    return %c0_i32, %c0_i32_0 : i32, i32
  }
}

</mosaic_0001>

<llo_original>
// kernel: audio_diffusion_conditional_forward.3
$region0: #{audio_diffusion_conditional_forward.3}
  #allocation0 [shape = 'u32[]', space=smem, size = 0x4, offset = 0x4, fixed_abs, tag = 'smem constant byte address 0x4 - core index']
  #allocation1 [shape = 'u32[144,128]{1,0:T(1,128)}', space=vmem, size = 0x12000, scoped, tag = 'internal scratch']
  %s0 = inlined_call_operand.vmem [shape: f32[384,32], index: 0, kind: input, shape index: {}]
  %s1 = inlined_call_operand.vmem [shape: f32[392,32], index: 1, kind: input, shape index: {}]
  %s2 = inlined_call_operand.vmem [shape: f32[448,64], index: 2, kind: input, shape index: {}]
  %s3 = inlined_call_operand.vmem [shape: f32[8,128], index: 3, kind: output, shape index: {}]
  %s4 = sld [smem:[#allocation0]]
  $region22: #{audio_diffusion_conditional_forward.3} parent=0
    _
  %s6 = ssub.s32 1, %s4
  %s7 = scalar_select 0, %s6, %s4
  // Predicated region
  $region2: #{audio_diffusion_conditional_forward.3} parent=0 // pred_check
    _
  $region3: #{audio_diffusion_conditional_forward.3} parent=0 // pred_check_branch
    %9 = sbr.rel (0) target = $region5
  $region4: #{audio_diffusion_conditional_forward.3} parent=0 // pred_region
    _
  $region5: #{audio_diffusion_conditional_forward.3} parent=0 // pred_fallthru
    _
  // Predicated region
  $region6: #{audio_diffusion_conditional_forward.3} parent=0 // pred_check
    _
  $region7: #{audio_diffusion_conditional_forward.3} parent=0 // pred_check_branch
    %11 = sbr.rel (0) target = $region9
  $region8: #{audio_diffusion_conditional_forward.3} parent=0 // pred_region
    _
  $region9: #{audio_diffusion_conditional_forward.3} parent=0 // pred_fallthru
    _
  // Predicated region
  $region10: #{audio_diffusion_conditional_forward.3} parent=0 // pred_check
    _
  $region11: #{audio_diffusion_conditional_forward.3} parent=0 // pred_check_branch
    %13 = sbr.rel (0) target = $region13
  $region12: #{audio_diffusion_conditional_forward.3} parent=0 // pred_region
    _
  $region13: #{audio_diffusion_conditional_forward.3} parent=0 // pred_fallthru
    _
  %v14 = vld [vmem:[%s0] sm:$0xff]
  %v15 = vld [vmem:[%s0 + $0x8] sm:$0xff]
  %v16 = vld [vmem:[%s0 + $0x10] sm:$0xff]
  %v17 = vld [vmem:[%s0 + $0x18] sm:$0xff]
  %v18 = vld [vmem:[%s0 + $0x20] sm:$0xff]
  %v19 = vld [vmem:[%s0 + $0x28] sm:$0xff]
  %v20 = vld [vmem:[%s0 + $0x30] sm:$0xff]
  %v21 = vld [vmem:[%s0 + $0x38] sm:$0xff]
  %v22 = vld [vmem:[%s0 + $0x40] sm:$0xff]
  %v23 = vld [vmem:[%s0 + $0x48] sm:$0xff]
  %v24 = vld [vmem:[%s0 + $0x50] sm:$0xff]
  %v25 = vld [vmem:[%s0 + $0x58] sm:$0xff]
  %v26 = vld [vmem:[%s0 + $0x60] sm:$0xff]
  %v27 = vld [vmem:[%s0 + $0x68] sm:$0xff]
  %v28 = vld [vmem:[%s0 + $0x70] sm:$0xff]
  %v29 = vld [vmem:[%s0 + $0x78] sm:$0xff]
  %v30 = vld [vmem:[%s0 + $0x80] sm:$0xff]
  %v31 = vld [vmem:[%s0 + $0x88] sm:$0xff]
  %v32 = vld [vmem:[%s0 + $0x90] sm:$0xff]
  %v33 = vld [vmem:[%s0 + $0x98] sm:$0xff]
  %v34 = vld [vmem:[%s0 + $0xa0] sm:$0xff]
  %v35 = vld [vmem:[%s0 + $0xa8] sm:$0xff]
  %v36 = vld [vmem:[%s0 + $0xb0] sm:$0xff]
  %v37 = vld [vmem:[%s0 + $0xb8] sm:$0xff]
  %v38 = vld [vmem:[%s0 + $0xc0] sm:$0xff]
  %v39 = vld [vmem:[%s0 + $0xc8] sm:$0xff]
  %v40 = vld [vmem:[%s0 + $0xd0] sm:$0xff]
  %v41 = vld [vmem:[%s0 + $0xd8] sm:$0xff]
  %v42 = vld [vmem:[%s0 + $0xe0] sm:$0xff]
  %v43 = vld [vmem:[%s0 + $0xe8] sm:$0xff]
  %v44 = vld [vmem:[%s0 + $0xf0] sm:$0xff]
  %v45 = vld [vmem:[%s0 + $0xf8] sm:$0xff]
  %v46 = vmul.f32 %v30, %v14
  %v47 = vmul.f32 %v31, %v15
  %v48 = vmul.f32 %v32, %v16
  %v49 = vmul.f32 %v33, %v17
  %v50 = vmul.f32 %v34, %v18
  %v51 = vmul.f32 %v35, %v19
  %v52 = vmul.f32 %v36, %v20
  %v53 = vmul.f32 %v37, %v21
  %v54 = vmul.f32 %v38, %v22
  %v55 = vmul.f32 %v39, %v23
  %v56 = vmul.f32 %v40, %v24
  %v57 = vmul.f32 %v41, %v25
  %v58 = vmul.f32 %v42, %v26
  %v59 = vmul.f32 %v43, %v27
  %v60 = vmul.f32 %v44, %v28
  %v61 = vmul.f32 %v45, %v29
  %v62 = vadd.f32 %v46, %v54
  %v63 = vadd.f32 %v47, %v55
  %v64 = vadd.f32 %v48, %v56
  %v65 = vadd.f32 %v49, %v57
  %v66 = vadd.f32 %v50, %v58
  %v67 = vadd.f32 %v51, %v59
  %v68 = vadd.f32 %v52, %v60
  %v69 = vadd.f32 %v53, %v61
  %v70 = vmul.f32 %v30, %v22
  %v71 = vmul.f32 %v31, %v23
  %v72 = vmul.f32 %v32, %v24
  %v73 = vmul.f32 %v33, %v25
  %v74 = vmul.f32 %v34, %v26
  %v75 = vmul.f32 %v35, %v27
  %v76 = vmul.f32 %v36, %v28
  %v77 = vmul.f32 %v37, %v29
  %v78 = vmul.f32 %v38, %v14
  %v79 = vmul.f32 %v39, %v15
  %v80 = vmul.f32 %v40, %v16
  %v81 = vmul.f32 %v41, %v17
  %v82 = vmul.f32 %v42, %v18
  %v83 = vmul.f32 %v43, %v19
  %v84 = vmul.f32 %v44, %v20
  %v85 = vmul.f32 %v45, %v21
  %v86 = vsub.f32 %v70, %v78
  %v87 = vsub.f32 %v71, %v79
  %v88 = vsub.f32 %v72, %v80
  %v89 = vsub.f32 %v73, %v81
  %v90 = vsub.f32 %v74, %v82
  %v91 = vsub.f32 %v75, %v83
  %v92 = vsub.f32 %v76, %v84
  %v93 = vsub.f32 %v77, %v85
  %v94 = vld [vmem:[%s1] sm:$0xff]
  %v95 = vld [vmem:[%s1 + $0x8] sm:$0x1]
  %v96 = vlaneseq
  %v97 = vshrl.u32 %v96, 7
  %v98 = vsub.s32 0, %v97
  %v99 = vrot.slane %v95, %v98
  %vm100 = vcmask 64512
  %v102 = vsel %vm100, %v62, 0
  %v105 = vsel %vm100, %v63, 0
  %v108 = vsel %vm100, %v64, 0
  %v111 = vsel %vm100, %v65, 0
  %v114 = vsel %vm100, %v66, 0
  %v117 = vsel %vm100, %v67, 0
  %v120 = vsel %vm100, %v68, 0
  %v123 = vsel %vm100, %v69, 0
  %125 = vmatprep.subr.mxu0 0.0
  %126 = vmatpush1.msra.mxu0 0.0
  %127 = vmatprep.subr.mxu0 0.0
  %128 = vmatpush1.msra.mxu0 0.0
  %129 = vmatprep.subr.mxu0 0.0
  %130 = vmatpush1.msra.mxu0 0.0
  %131 = vmatprep.subr.mxu0 0.0
  %132 = vmatpush1.msra.mxu0 0.0
  %133 = vmatprep.subr.mxu0 0.0
  %134 = vmatpush1.msra.mxu0 0.0
  %135 = vmatprep.subr.mxu0 0.0
  %136 = vmatpush1.msra.mxu0 0.0
  %137 = vmatprep.subr.mxu0 0.0
  %138 = vmatpush1.msra.mxu0 0.0
  %139 = vmatprep.subr.mxu0 0.0
  %140 = vmatpush1.msra.mxu0 0.0
  %141 = vmatprep.subr.mxu0 0.0
  %142 = vmatpush1.msra.mxu0 0.0
  %143 = vmatprep.subr.mxu0 0.0
  %144 = vmatpush1.msra.mxu0 0.0
  %145 = vmatprep.subr.mxu0 0.0
  %146 = vmatpush1.msra.mxu0 0.0
  %147 = vmatprep.subr.mxu0 0.0
  %148 = vmatpush1.msra.mxu0 0.0
  %149 = vmatprep.subr.mxu0 0.0
  %150 = vmatpush1.msra.mxu0 0.0
  %151 = vmatprep.subr.mxu0 0.0
  %152 = vmatpush1.msra.mxu0 0.0
  %153 = vmatprep.subr.mxu0 0.0
  %154 = vmatpush1.msra.mxu0 0.0
  %155 = vmatprep.subr.mxu0 0.0
  %156 = vmatpush1.msra.mxu0 %v94
  %157 = vmatprep.subr.mxu0 0.0
  %158 = vmatpush2.msra.mxu0 0.0
  %159 = vmatprep.subr.mxu0 0.0
  %160 = vmatpush2.msra.mxu0 0.0
  %161 = vmatprep.subr.mxu0 0.0
  %162 = vmatpush2.msra.mxu0 0.0
  %163 = vmatprep.subr.mxu0 0.0
  %164 = vmatpush2.msra.mxu0 0.0
  %165 = vmatprep.subr.mxu0 0.0
  %166 = vmatpush2.msra.mxu0 0.0
  %167 = vmatprep.subr.mxu0 0.0
  %168 = vmatpush2.msra.mxu0 0.0
  %169 = vmatprep.subr.mxu0 0.0
  %170 = vmatpush2.msra.mxu0 0.0
  %171 = vmatprep.subr.mxu0 0.0
  %172 = vmatpush2.msra.mxu0 0.0
  %173 = vmatprep.subr.mxu0 0.0
  %174 = vmatpush2.msra.mxu0 0.0
  %175 = vmatprep.subr.mxu0 0.0
  %176 = vmatpush2.msra.mxu0 0.0
  %177 = vmatprep.subr.mxu0 0.0
  %178 = vmatpush2.msra.mxu0 0.0
  %179 = vmatprep.subr.mxu0 0.0
  %180 = vmatpush2.msra.mxu0 0.0
  %181 = vmatprep.subr.mxu0 0.0
  %182 = vmatpush2.msra.mxu0 0.0
  %183 = vmatprep.subr.mxu0 0.0
  %184 = vmatpush2.msra.mxu0 0.0
  %185 = vmatprep.subr.mxu0 0.0
  %186 = vmatpush2.msra.mxu0 0.0
  %187 = vmatprep.subr.mxu0 0.0
  %188 = vmatpush2.msra.mxu0 0.0
  %189 = vmatprep.mubr.f32.mxu0 0.0
  %190 = vmatmul.mubr.f32.gmra.mxu0 %v102
  %v191 = vpop.f32.mrf.mxu0
  %v192 = vadd.f32 %v99, %v191
  %v193 = vpop.f32.mrf.mxu0
  %194 = vmatprep.mubr.f32.mxu0 0.0
  %195 = vmatmul.mubr.f32.gmra.mxu0 %v105
  %v196 = vpop.f32.mrf.mxu0
  %v197 = vadd.f32 %v99, %v196
  %v198 = vpop.f32.mrf.mxu0
  %199 = vmatprep.mubr.f32.mxu0 0.0
  %200 = vmatmul.mubr.f32.gmra.mxu0 %v108
  %v201 = vpop.f32.mrf.mxu0
  %v202 = vadd.f32 %v99, %v201
  %v203 = vpop.f32.mrf.mxu0
  %204 = vmatprep.mubr.f32.mxu0 0.0
  %205 = vmatmul.mubr.f32.gmra.mxu0 %v111
  %v206 = vpop.f32.mrf.mxu0
  %v207 = vadd.f32 %v99, %v206
  %v208 = vpop.f32.mrf.mxu0
  %209 = vmatprep.mubr.f32.mxu0 0.0
  %210 = vmatmul.mubr.f32.gmra.mxu0 %v114
  %v211 = vpop.f32.mrf.mxu0
  %v212 = vadd.f32 %v99, %v211
  %v213 = vpop.f32.mrf.mxu0
  %214 = vmatprep.mubr.f32.mxu0 0.0
  %215 = vmatmul.mubr.f32.gmra.mxu0 %v117
  %v216 = vpop.f32.mrf.mxu0
  %v217 = vadd.f32 %v99, %v216
  %v218 = vpop.f32.mrf.mxu0
  %219 = vmatprep.mubr.f32.mxu0 0.0
  %220 = vmatmul.mubr.f32.gmra.mxu0 %v120
  %v221 = vpop.f32.mrf.mxu0
  %v222 = vadd.f32 %v99, %v221
  %v223 = vpop.f32.mrf.mxu0
  %224 = vmatprep.mubr.f32.mxu0 0.0
  %225 = vmatmul.mubr.f32.gmra.mxu0 %v123
  %v226 = vpop.f32.mrf.mxu0
  %v227 = vadd.f32 %v99, %v226
  %v228 = vpop.f32.mrf.mxu0
  %229 = vdwg.mxu0
  %v230 = vld [vmem:[%s2 + $0xc0] sm:$0xff]
  %v231 = vld [vmem:[%s2 + $0xc8] sm:$0xff]
  %v232 = vld [vmem:[%s2 + $0xd0] sm:$0xff]
  %v233 = vld [vmem:[%s2 + $0xd8] sm:$0xff]
  %v234 = vld [vmem:[%s2 + $0xe0] sm:$0xff]
  %v235 = vld [vmem:[%s2 + $0xe8] sm:$0xff]
  %v236 = vld [vmem:[%s2 + $0xf0] sm:$0xff]
  %v237 = vld [vmem:[%s2 + $0xf8] sm:$0xff]
  %v238 = vld [vmem:[%s2 + $0x100] sm:$0xff]
  %v239 = vld [vmem:[%s2 + $0x108] sm:$0xff]
  %v240 = vld [vmem:[%s2 + $0x110] sm:$0xff]
  %v241 = vld [vmem:[%s2 + $0x118] sm:$0xff]
  %v242 = vld [vmem:[%s2 + $0x120] sm:$0xff]
  %v243 = vld [vmem:[%s2 + $0x128] sm:$0xff]
  %v244 = vld [vmem:[%s2 + $0x130] sm:$0xff]
  %v245 = vld [vmem:[%s2 + $0x138] sm:$0xff]
  %v246 = vld [vmem:[%s1 + $0x10] sm:$0xff]
  %v247 = vld [vmem:[%s1 + $0x18] sm:$0xff]
  %v248 = vld [vmem:[%s1 + $0x20] sm:$0xff]
  %v249 = vld [vmem:[%s1 + $0x28] sm:$0xff]
  %vm250 = vcmask 261120
  %v252 = vsel %vm250, %v192, 0
  %v255 = vsel %vm250, %v197, 0
  %v258 = vsel %vm250, %v202, 0
  %v261 = vsel %vm250, %v207, 0
  %v264 = vsel %vm250, %v212, 0
  %v267 = vsel %vm250, %v217, 0
  %v270 = vsel %vm250, %v222, 0
  %v273 = vsel %vm250, %v227, 0
  %275 = vmatprep.subr.mxu0 0.0
  %276 = vmatpush1.msra.mxu0 0.0
  %277 = vmatprep.subr.mxu0 0.0
  %278 = vmatpush1.msra.mxu0 0.0
  %279 = vmatprep.subr.mxu0 0.0
  %280 = vmatpush1.msra.mxu0 0.0
  %281 = vmatprep.subr.mxu0 0.0
  %282 = vmatpush1.msra.mxu0 0.0
  %283 = vmatprep.subr.mxu0 0.0
  %284 = vmatpush1.msra.mxu0 0.0
  %285 = vmatprep.subr.mxu0 0.0
  %286 = vmatpush1.msra.mxu0 0.0
  %287 = vmatprep.subr.mxu0 0.0
  %288 = vmatpush1.msra.mxu0 0.0
  %289 = vmatprep.subr.mxu0 0.0
  %290 = vmatpush1.msra.mxu0 0.0
  %291 = vmatprep.subr.mxu0 0.0
  %292 = vmatpush1.msra.mxu0 0.0
  %293 = vmatprep.subr.mxu0 0.0
  %294 = vmatpush1.msra.mxu0 0.0
  %295 = vmatprep.subr.mxu0 0.0
  %296 = vmatpush1.msra.mxu0 0.0
  %297 = vmatprep.subr.mxu0 0.0
  %298 = vmatpush1.msra.mxu0 0.0
  %299 = vmatprep.subr.mxu0 0.0
  %300 = vmatpush1.msra.mxu0 %v249
  %301 = vmatprep.subr.mxu0 0.0
  %302 = vmatpush1.msra.mxu0 %v248
  %303 = vmatprep.subr.mxu0 0.0
  %304 = vmatpush1.msra.mxu0 %v247
  %305 = vmatprep.subr.mxu0 0.0
  %306 = vmatpush1.msra.mxu0 %v246
  %307 = vmatprep.subr.mxu0 0.0
  %308 = vmatpush2.msra.mxu0 0.0
  %309 = vmatprep.subr.mxu0 0.0
  %310 = vmatpush2.msra.mxu0 0.0
  %311 = vmatprep.subr.mxu0 0.0
  %312 = vmatpush2.msra.mxu0 0.0
  %313 = vmatprep.subr.mxu0 0.0
  %314 = vmatpush2.msra.mxu0 0.0
  %315 = vmatprep.subr.mxu0 0.0
  %316 = vmatpush2.msra.mxu0 0.0
  %317 = vmatprep.subr.mxu0 0.0
  %318 = vmatpush2.msra.mxu0 0.0
  %319 = vmatprep.subr.mxu0 0.0
  %320 = vmatpush2.msra.mxu0 0.0
  %321 = vmatprep.subr.mxu0 0.0
  %322 = vmatpush2.msra.mxu0 0.0
  %323 = vmatprep.subr.mxu0 0.0
  %324 = vmatpush2.msra.mxu0 0.0
  %325 = vmatprep.subr.mxu0 0.0
  %326 = vmatpush2.msra.mxu0 0.0
  %327 = vmatprep.subr.mxu0 0.0
  %328 = vmatpush2.msra.mxu0 0.0
  %329 = vmatprep.subr.mxu0 0.0
  %330 = vmatpush2.msra.mxu0 0.0
  %331 = vmatprep.subr.mxu0 0.0
  %332 = vmatpush2.msra.mxu0 0.0
  %333 = vmatprep.subr.mxu0 0.0
  %334 = vmatpush2.msra.mxu0 0.0
  %335 = vmatprep.subr.mxu0 0.0
  %336 = vmatpush2.msra.mxu0 0.0
  %337 = vmatprep.subr.mxu0 0.0
  %338 = vmatpush2.msra.mxu0 0.0
  %339 = vmatprep.mubr.f32.mxu0 0.0
  %340 = vmatmul.mubr.f32.gmra.mxu0 %v252
  %v341 = vpop.f32.mrf.mxu0
  %v342 = vadd.f32 0.0, %v341
  %v343 = vpop.f32.mrf.mxu0
  %344 = vmatprep.mubr.f32.mxu0 0.0
  %345 = vmatmul.mubr.f32.gmra.mxu0 %v255
  %v346 = vpop.f32.mrf.mxu0
  %v347 = vadd.f32 0.0, %v346
  %v348 = vpop.f32.mrf.mxu0
  %349 = vmatprep.mubr.f32.mxu0 0.0
  %350 = vmatmul.mubr.f32.gmra.mxu0 %v258
  %v351 = vpop.f32.mrf.mxu0
  %v352 = vadd.f32 0.0, %v351
  %v353 = vpop.f32.mrf.mxu0
  %354 = vmatprep.mubr.f32.mxu0 0.0
  %355 = vmatmul.mubr.f32.gmra.mxu0 %v261
  %v356 = vpop.f32.mrf.mxu0
  %v357 = vadd.f32 0.0, %v356
  %v358 = vpop.f32.mrf.mxu0
  %359 = vmatprep.mubr.f32.mxu0 0.0
  %360 = vmatmul.mubr.f32.gmra.mxu0 %v264
  %v361 = vpop.f32.mrf.mxu0
  %v362 = vadd.f32 0.0, %v361
  %v363 = vpop.f32.mrf.mxu0
  %364 = vmatprep.mubr.f32.mxu0 0.0
  %365 = vmatmul.mubr.f32.gmra.mxu0 %v267
  %v366 = vpop.f32.mrf.mxu0
  %v367 = vadd.f32 0.0, %v366
  %v368 = vpop.f32.mrf.mxu0
  %369 = vmatprep.mubr.f32.mxu0 0.0
  %370 = vmatmul.mubr.f32.gmra.mxu0 %v270
  %v371 = vpop.f32.mrf.mxu0
  %v372 = vadd.f32 0.0, %v371
  %v373 = vpop.f32.mrf.mxu0
  %374 = vmatprep.mubr.f32.mxu0 0.0
  %375 = vmatmul.mubr.f32.gmra.mxu0 %v273
  %v376 = vpop.f32.mrf.mxu0
  %v377 = vadd.f32 0.0, %v376
  %v378 = vpop.f32.mrf.mxu0
  %379 = vdwg.mxu0
  %v380 = vld [vmem:[%s1 + $0x30] sm:$0xff]
  %v381 = vld [vmem:[%s1 + $0x38] sm:$0xff]
  %v382 = vld [vmem:[%s1 + $0x40] sm:$0xff]
  %v383 = vld [vmem:[%s1 + $0x48] sm:$0xff]
  %384 = vmatprep.subr.mxu0 0.0
  %385 = vmatpush1.msra.mxu0 0.0
  %386 = vmatprep.subr.mxu0 0.0
  %387 = vmatpush1.msra.mxu0 0.0
  %388 = vmatprep.subr.mxu0 0.0
  %389 = vmatpush1.msra.mxu0 0.0
  %390 = vmatprep.subr.mxu0 0.0
  %391 = vmatpush1.msra.mxu0 0.0
  %392 = vmatprep.subr.mxu0 0.0
  %393 = vmatpush1.msra.mxu0 0.0
  %394 = vmatprep.subr.mxu0 0.0
  %395 = vmatpush1.msra.mxu0 0.0
  %396 = vmatprep.subr.mxu0 0.0
  %397 = vmatpush1.msra.mxu0 0.0
  %398 = vmatprep.subr.mxu0 0.0
  %399 = vmatpush1.msra.mxu0 0.0
  %400 = vmatprep.subr.mxu0 0.0
  %401 = vmatpush1.msra.mxu0 0.0
  %402 = vmatprep.subr.mxu0 0.0
  %403 = vmatpush1.msra.mxu0 0.0
  %404 = vmatprep.subr.mxu0 0.0
  %405 = vmatpush1.msra.mxu0 0.0
  %406 = vmatprep.subr.mxu0 0.0
  %407 = vmatpush1.msra.mxu0 0.0
  %408 = vmatprep.subr.mxu0 0.0
  %409 = vmatpush1.msra.mxu0 %v383
  %410 = vmatprep.subr.mxu0 0.0
  %411 = vmatpush1.msra.mxu0 %v382
  %412 = vmatprep.subr.mxu0 0.0
  %413 = vmatpush1.msra.mxu0 %v381
  %414 = vmatprep.subr.mxu0 0.0
  %415 = vmatpush1.msra.mxu0 %v380
  %416 = vmatprep.subr.mxu0 0.0
  %417 = vmatpush2.msra.mxu0 0.0
  %418 = vmatprep.subr.mxu0 0.0
  %419 = vmatpush2.msra.mxu0 0.0
  %420 = vmatprep.subr.mxu0 0.0
  %421 = vmatpush2.msra.mxu0 0.0
  %422 = vmatprep.subr.mxu0 0.0
  %423 = vmatpush2.msra.mxu0 0.0
  %424 = vmatprep.subr.mxu0 0.0
  %425 = vmatpush2.msra.mxu0 0.0
  %426 = vmatprep.subr.mxu0 0.0
  %427 = vmatpush2.msra.mxu0 0.0
  %428 = vmatprep.subr.mxu0 0.0
  %429 = vmatpush2.msra.mxu0 0.0
  %430 = vmatprep.subr.mxu0 0.0
  %431 = vmatpush2.msra.mxu0 0.0
  %432 = vmatprep.subr.mxu0 0.0
  %433 = vmatpush2.msra.mxu0 0.0
  %434 = vmatprep.subr.mxu0 0.0
  %435 = vmatpush2.msra.mxu0 0.0
  %436 = vmatprep.subr.mxu0 0.0
  %437 = vmatpush2.msra.mxu0 0.0
  %438 = vmatprep.subr.mxu0 0.0
  %439 = vmatpush2.msra.mxu0 0.0
  %440 = vmatprep.subr.mxu0 0.0
  %441 = vmatpush2.msra.mxu0 0.0
  %442 = vmatprep.subr.mxu0 0.0
  %443 = vmatpush2.msra.mxu0 0.0
  %444 = vmatprep.subr.mxu0 0.0
  %445 = vmatpush2.msra.mxu0 0.0
  %446 = vmatprep.subr.mxu0 0.0
  %447 = vmatpush2.msra.mxu0 0.0
  %448 = vmatprep.mubr.f32.mxu0 0.0
  %449 = vmatmul.mubr.f32.gmra.mxu0 %v252
  %v450 = vpop.f32.mrf.mxu0
  %v451 = vadd.f32 0.0, %v450
  %v452 = vpop.f32.mrf.mxu0
  %453 = vmatprep.mubr.f32.mxu0 0.0
  %454 = vmatmul.mubr.f32.gmra.mxu0 %v255
  %v455 = vpop.f32.mrf.mxu0
  %v456 = vadd.f32 0.0, %v455
  %v457 = vpop.f32.mrf.mxu0
  %458 = vmatprep.mubr.f32.mxu0 0.0
  %459 = vmatmul.mubr.f32.gmra.mxu0 %v258
  %v460 = vpop.f32.mrf.mxu0
  %v461 = vadd.f32 0.0, %v460
  %v462 = vpop.f32.mrf.mxu0
  %463 = vmatprep.mubr.f32.mxu0 0.0
  %464 = vmatmul.mubr.f32.gmra.mxu0 %v261
  %v465 = vpop.f32.mrf.mxu0
  %v466 = vadd.f32 0.0, %v465
  %v467 = vpop.f32.mrf.mxu0
  %468 = vmatprep.mubr.f32.mxu0 0.0
  %469 = vmatmul.mubr.f32.gmra.mxu0 %v264
  %v470 = vpop.f32.mrf.mxu0
  %v471 = vadd.f32 0.0, %v470
  %v472 = vpop.f32.mrf.mxu0
  %473 = vmatprep.mubr.f32.mxu0 0.0
  %474 = vmatmul.mubr.f32.gmra.mxu0 %v267
  %v475 = vpop.f32.mrf.mxu0
  %v476 = vadd.f32 0.0, %v475
  %v477 = vpop.f32.mrf.mxu0
  %478 = vmatprep.mubr.f32.mxu0 0.0
  %479 = vmatmul.mubr.f32.gmra.mxu0 %v270
  %v480 = vpop.f32.mrf.mxu0
  %v481 = vadd.f32 0.0, %v480
  %v482 = vpop.f32.mrf.mxu0
  %483 = vmatprep.mubr.f32.mxu0 0.0
  %484 = vmatmul.mubr.f32.gmra.mxu0 %v273
  %v485 = vpop.f32.mrf.mxu0
  %v486 = vadd.f32 0.0, %v485
  %v487 = vpop.f32.mrf.mxu0
  %488 = vdwg.mxu0
  %v489 = vld [vmem:[%s1 + $0x50] sm:$0xff]
  %v490 = vld [vmem:[%s1 + $0x58] sm:$0xff]
  %v491 = vld [vmem:[%s1 + $0x60] sm:$0xff]
  %v492 = vld [vmem:[%s1 + $0x68] sm:$0xff]
  %493 = vmatprep.subr.mxu0 0.0
  %494 = vmatpush1.msra.mxu0 0.0
  %495 = vmatprep.subr.mxu0 0.0
  %496 = vmatpush1.msra.mxu0 0.0
  %497 = vmatprep.subr.mxu0 0.0
  %498 = vmatpush1.msra.mxu0 0.0
  %499 = vmatprep.subr.mxu0 0.0
  %500 = vmatpush1.msra.mxu0 0.0
  %501 = vmatprep.subr.mxu0 0.0
  %502 = vmatpush1.msra.mxu0 0.0
  %503 = vmatprep.subr.mxu0 0.0
  %504 = vmatpush1.msra.mxu0 0.0
  %505 = vmatprep.subr.mxu0 0.0
  %506 = vmatpush1.msra.mxu0 0.0
  %507 = vmatprep.subr.mxu0 0.0
  %508 = vmatpush1.msra.mxu0 0.0
  %509 = vmatprep.subr.mxu0 0.0
  %510 = vmatpush1.msra.mxu0 0.0
  %511 = vmatprep.subr.mxu0 0.0
  %512 = vmatpush1.msra.mxu0 0.0
  %513 = vmatprep.subr.mxu0 0.0
  %514 = vmatpush1.msra.mxu0 0.0
  %515 = vmatprep.subr.mxu0 0.0
  %516 = vmatpush1.msra.mxu0 0.0
  %517 = vmatprep.subr.mxu0 0.0
  %518 = vmatpush1.msra.mxu0 %v492
  %519 = vmatprep.subr.mxu0 0.0
  %520 = vmatpush1.msra.mxu0 %v491
  %521 = vmatprep.subr.mxu0 0.0
  %522 = vmatpush1.msra.mxu0 %v490
  %523 = vmatprep.subr.mxu0 0.0
  %524 = vmatpush1.msra.mxu0 %v489
  %525 = vmatprep.subr.mxu0 0.0
  %526 = vmatpush2.msra.mxu0 0.0
  %527 = vmatprep.subr.mxu0 0.0
  %528 = vmatpush2.msra.mxu0 0.0
  %529 = vmatprep.subr.mxu0 0.0
  %530 = vmatpush2.msra.mxu0 0.0
  %531 = vmatprep.subr.mxu0 0.0
  %532 = vmatpush2.msra.mxu0 0.0
  %533 = vmatprep.subr.mxu0 0.0
  %534 = vmatpush2.msra.mxu0 0.0
  %535 = vmatprep.subr.mxu0 0.0
  %536 = vmatpush2.msra.mxu0 0.0
  %537 = vmatprep.subr.mxu0 0.0
  %538 = vmatpush2.msra.mxu0 0.0
  %539 = vmatprep.subr.mxu0 0.0
  %540 = vmatpush2.msra.mxu0 0.0
  %541 = vmatprep.subr.mxu0 0.0
  %542 = vmatpush2.msra.mxu0 0.0
  %543 = vmatprep.subr.mxu0 0.0
  %544 = vmatpush2.msra.mxu0 0.0
  %545 = vmatprep.subr.mxu0 0.0
  %546 = vmatpush2.msra.mxu0 0.0
  %547 = vmatprep.subr.mxu0 0.0
  %548 = vmatpush2.msra.mxu0 0.0
  %549 = vmatprep.subr.mxu0 0.0
  %550 = vmatpush2.msra.mxu0 0.0
  %551 = vmatprep.subr.mxu0 0.0
  %552 = vmatpush2.msra.mxu0 0.0
  %553 = vmatprep.subr.mxu0 0.0
  %554 = vmatpush2.msra.mxu0 0.0
  %555 = vmatprep.subr.mxu0 0.0
  %556 = vmatpush2.msra.mxu0 0.0
  %557 = vmatprep.mubr.f32.mxu0 0.0
  %558 = vmatmul.mubr.f32.gmra.mxu0 %v252
  %v559 = vpop.f32.mrf.mxu0
  %v560 = vadd.f32 0.0, %v559
  %v561 = vpop.f32.mrf.mxu0
  %562 = vmatprep.mubr.f32.mxu0 0.0
  %563 = vmatmul.mubr.f32.gmra.mxu0 %v255
  %v564 = vpop.f32.mrf.mxu0
  %v565 = vadd.f32 0.0, %v564
  %v566 = vpop.f32.mrf.mxu0
  %567 = vmatprep.mubr.f32.mxu0 0.0
  %568 = vmatmul.mubr.f32.gmra.mxu0 %v258
  %v569 = vpop.f32.mrf.mxu0
  %v570 = vadd.f32 0.0, %v569
  %v571 = vpop.f32.mrf.mxu0
  %572 = vmatprep.mubr.f32.mxu0 0.0
  %573 = vmatmul.mubr.f32.gmra.mxu0 %v261
  %v574 = vpop.f32.mrf.mxu0
  %v575 = vadd.f32 0.0, %v574
  %v576 = vpop.f32.mrf.mxu0
  %577 = vmatprep.mubr.f32.mxu0 0.0
  %578 = vmatmul.mubr.f32.gmra.mxu0 %v264
  %v579 = vpop.f32.mrf.mxu0
  %v580 = vadd.f32 0.0, %v579
  %v581 = vpop.f32.mrf.mxu0
  %582 = vmatprep.mubr.f32.mxu0 0.0
  %583 = vmatmul.mubr.f32.gmra.mxu0 %v267
  %v584 = vpop.f32.mrf.mxu0
  %v585 = vadd.f32 0.0, %v584
  %v586 = vpop.f32.mrf.mxu0
  %587 = vmatprep.mubr.f32.mxu0 0.0
  %588 = vmatmul.mubr.f32.gmra.mxu0 %v270
  %v589 = vpop.f32.mrf.mxu0
  %v590 = vadd.f32 0.0, %v589
  %v591 = vpop.f32.mrf.mxu0
  %592 = vmatprep.mubr.f32.mxu0 0.0
  %593 = vmatmul.mubr.f32.gmra.mxu0 %v273
  %v594 = vpop.f32.mrf.mxu0
  %v595 = vadd.f32 0.0, %v594
  %v596 = vpop.f32.mrf.mxu0
  %597 = vdwg.mxu0
  %vm598 = vcmask 523264
  %v600 = vsel %vm598, %v230, 0
  %v603 = vsel %vm598, %v231, 0
  %v606 = vsel %vm598, %v232, 0
  %v609 = vsel %vm598, %v233, 0
  %v612 = vsel %vm598, %v234, 0
  %v615 = vsel %vm598, %v235, 0
  %v618 = vsel %vm598, %v236, 0
  %v621 = vsel %vm598, %v237, 0
  %623 = vmatprep.subr.mxu0 0.0
  %624 = vmatpush1.msra.mxu0 0.0
  %625 = vmatprep.subr.mxu0 0.0
  %626 = vmatpush1.msra.mxu0 0.0
  %627 = vmatprep.subr.mxu0 0.0
  %628 = vmatpush1.msra.mxu0 0.0
  %629 = vmatprep.subr.mxu0 0.0
  %630 = vmatpush1.msra.mxu0 0.0
  %631 = vmatprep.subr.mxu0 0.0
  %632 = vmatpush1.msra.mxu0 0.0
  %633 = vmatprep.subr.mxu0 0.0
  %634 = vmatpush1.msra.mxu0 0.0
  %635 = vmatprep.subr.mxu0 0.0
  %636 = vmatpush1.msra.mxu0 0.0
  %637 = vmatprep.subr.mxu0 0.0
  %638 = vmatpush1.msra.mxu0 0.0
  %639 = vmatprep.subr.mxu0 0.0
  %640 = vmatpush1.msra.mxu0 %v377
  %641 = vmatprep.subr.mxu0 0.0
  %642 = vmatpush1.msra.mxu0 %v372
  %643 = vmatprep.subr.mxu0 0.0
  %644 = vmatpush1.msra.mxu0 %v367
  %645 = vmatprep.subr.mxu0 0.0
  %646 = vmatpush1.msra.mxu0 %v362
  %647 = vmatprep.subr.mxu0 0.0
  %648 = vmatpush1.msra.mxu0 %v357
  %649 = vmatprep.subr.mxu0 0.0
  %650 = vmatpush1.msra.mxu0 %v352
  %651 = vmatprep.subr.mxu0 0.0
  %652 = vmatpush1.msra.mxu0 %v347
  %653 = vmatprep.subr.mxu0 0.0
  %654 = vmatpush1.msra.mxu0 %v342
  %655 = vmatprep.subr.mxu0 0.0
  %656 = vmatpush2.msra.mxu0 0.0
  %657 = vmatprep.subr.mxu0 0.0
  %658 = vmatpush2.msra.mxu0 0.0
  %659 = vmatprep.subr.mxu0 0.0
  %660 = vmatpush2.msra.mxu0 0.0
  %661 = vmatprep.subr.mxu0 0.0
  %662 = vmatpush2.msra.mxu0 0.0
  %663 = vmatprep.subr.mxu0 0.0
  %664 = vmatpush2.msra.mxu0 0.0
  %665 = vmatprep.subr.mxu0 0.0
  %666 = vmatpush2.msra.mxu0 0.0
  %667 = vmatprep.subr.mxu0 0.0
  %668 = vmatpush2.msra.mxu0 0.0
  %669 = vmatprep.subr.mxu0 0.0
  %670 = vmatpush2.msra.mxu0 0.0
  %671 = vmatprep.subr.mxu0 0.0
  %672 = vmatpush2.msra.mxu0 0.0
  %673 = vmatprep.subr.mxu0 0.0
  %674 = vmatpush2.msra.mxu0 0.0
  %675 = vmatprep.subr.mxu0 0.0
  %676 = vmatpush2.msra.mxu0 0.0
  %677 = vmatprep.subr.mxu0 0.0
  %678 = vmatpush2.msra.mxu0 0.0
  %679 = vmatprep.subr.mxu0 0.0
  %680 = vmatpush2.msra.mxu0 0.0
  %681 = vmatprep.subr.mxu0 0.0
  %682 = vmatpush2.msra.mxu0 0.0
  %683 = vmatprep.subr.mxu0 0.0
  %684 = vmatpush2.msra.mxu0 0.0
  %685 = vmatprep.subr.mxu0 0.0
  %686 = vmatpush2.msra.mxu0 0.0
  %687 = vmatprep.mubr.f32.mxu0 0.0
  %688 = vmatmul.mubr.f32.gmra.mxu0 %v600
  %v689 = vpop.f32.mrf.mxu0
  %v690 = vadd.f32 %v451, %v689
  %v691 = vpop.f32.mrf.mxu0
  %692 = vmatprep.mubr.f32.mxu0 0.0
  %693 = vmatmul.mubr.f32.gmra.mxu0 %v603
  %v694 = vpop.f32.mrf.mxu0
  %v695 = vadd.f32 %v456, %v694
  %v696 = vpop.f32.mrf.mxu0
  %697 = vmatprep.mubr.f32.mxu0 0.0
  %698 = vmatmul.mubr.f32.gmra.mxu0 %v606
  %v699 = vpop.f32.mrf.mxu0
  %v700 = vadd.f32 %v461, %v699
  %v701 = vpop.f32.mrf.mxu0
  %702 = vmatprep.mubr.f32.mxu0 0.0
  %703 = vmatmul.mubr.f32.gmra.mxu0 %v609
  %v704 = vpop.f32.mrf.mxu0
  %v705 = vadd.f32 %v466, %v704
  %v706 = vpop.f32.mrf.mxu0
  %707 = vmatprep.mubr.f32.mxu0 0.0
  %708 = vmatmul.mubr.f32.gmra.mxu0 %v612
  %v709 = vpop.f32.mrf.mxu0
  %v710 = vadd.f32 %v471, %v709
  %v711 = vpop.f32.mrf.mxu0
  %712 = vmatprep.mubr.f32.mxu0 0.0
  %713 = vmatmul.mubr.f32.gmra.mxu0 %v615
  %v714 = vpop.f32.mrf.mxu0
  %v715 = vadd.f32 %v476, %v714
  %v716 = vpop.f32.mrf.mxu0
  %717 = vmatprep.mubr.f32.mxu0 0.0
  %718 = vmatmul.mubr.f32.gmra.mxu0 %v618
  %v719 = vpop.f32.mrf.mxu0
  %v720 = vadd.f32 %v481, %v719
  %v721 = vpop.f32.mrf.mxu0
  %722 = vmatprep.mubr.f32.mxu0 0.0
  %723 = vmatmul.mubr.f32.gmra.mxu0 %v621
  %v724 = vpop.f32.mrf.mxu0
  %v725 = vadd.f32 %v486, %v724
  %v726 = vpop.f32.mrf.mxu0
  %727 = vdwg.mxu0
  %v729 = vsel %vm598, %v238, 0
  %v732 = vsel %vm598, %v239, 0
  %v735 = vsel %vm598, %v240, 0
  %v738 = vsel %vm598, %v241, 0
  %v741 = vsel %vm598, %v242, 0
  %v744 = vsel %vm598, %v243, 0
  %v747 = vsel %vm598, %v244, 0
  %v750 = vsel %vm598, %v245, 0
  %752 = vmatprep.subr.mxu0 0.0
  %753 = vmatpush1.msra.mxu0 0.0
  %754 = vmatprep.subr.mxu0 0.0
  %755 = vmatpush1.msra.mxu0 0.0
  %756 = vmatprep.subr.mxu0 0.0
  %757 = vmatpush1.msra.mxu0 0.0
  %758 = vmatprep.subr.mxu0 0.0
  %759 = vmatpush1.msra.mxu0 0.0
  %760 = vmatprep.subr.mxu0 0.0
  %761 = vmatpush1.msra.mxu0 0.0
  %762 = vmatprep.subr.mxu0 0.0
  %763 = vmatpush1.msra.mxu0 0.0
  %764 = vmatprep.subr.mxu0 0.0
  %765 = vmatpush1.msra.mxu0 0.0
  %766 = vmatprep.subr.mxu0 0.0
  %767 = vmatpush1.msra.mxu0 0.0
  %768 = vmatprep.subr.mxu0 0.0
  %769 = vmatpush1.msra.mxu0 %v595
  %770 = vmatprep.subr.mxu0 0.0
  %771 = vmatpush1.msra.mxu0 %v590
  %772 = vmatprep.subr.mxu0 0.0
  %773 = vmatpush1.msra.mxu0 %v585
  %774 = vmatprep.subr.mxu0 0.0
  %775 = vmatpush1.msra.mxu0 %v580
  %776 = vmatprep.subr.mxu0 0.0
  %777 = vmatpush1.msra.mxu0 %v575
  %778 = vmatprep.subr.mxu0 0.0
  %779 = vmatpush1.msra.mxu0 %v570
  %780 = vmatprep.subr.mxu0 0.0
  %781 = vmatpush1.msra.mxu0 %v565
  %782 = vmatprep.subr.mxu0 0.0
  %783 = vmatpush1.msra.mxu0 %v560
  %784 = vmatprep.subr.mxu0 0.0
  %785 = vmatpush2.msra.mxu0 0.0
  %786 = vmatprep.subr.mxu0 0.0
  %787 = vmatpush2.msra.mxu0 0.0
  %788 = vmatprep.subr.mxu0 0.0
  %789 = vmatpush2.msra.mxu0 0.0
  %790 = vmatprep.subr.mxu0 0.0
  %791 = vmatpush2.msra.mxu0 0.0
  %792 = vmatprep.subr.mxu0 0.0
  %793 = vmatpush2.msra.mxu0 0.0
  %794 = vmatprep.subr.mxu0 0.0
  %795 = vmatpush2.msra.mxu0 0.0
  %796 = vmatprep.subr.mxu0 0.0
  %797 = vmatpush2.msra.mxu0 0.0
  %798 = vmatprep.subr.mxu0 0.0
  %799 = vmatpush2.msra.mxu0 0.0
  %800 = vmatprep.subr.mxu0 0.0
  %801 = vmatpush2.msra.mxu0 0.0
  %802 = vmatprep.subr.mxu0 0.0
  %803 = vmatpush2.msra.mxu0 0.0
  %804 = vmatprep.subr.mxu0 0.0
  %805 = vmatpush2.msra.mxu0 0.0
  %806 = vmatprep.subr.mxu0 0.0
  %807 = vmatpush2.msra.mxu0 0.0
  %808 = vmatprep.subr.mxu0 0.0
  %809 = vmatpush2.msra.mxu0 0.0
  %810 = vmatprep.subr.mxu0 0.0
  %811 = vmatpush2.msra.mxu0 0.0
  %812 = vmatprep.subr.mxu0 0.0
  %813 = vmatpush2.msra.mxu0 0.0
  %814 = vmatprep.subr.mxu0 0.0
  %815 = vmatpush2.msra.mxu0 0.0
  %816 = vmatprep.mubr.f32.mxu0 0.0
  %817 = vmatmul.mubr.f32.gmra.mxu0 %v729
  %v818 = vpop.f32.mrf.mxu0
  %v819 = vadd.f32 0.0, %v818
  %v820 = vpop.f32.mrf.mxu0
  %821 = vmatprep.mubr.f32.mxu0 0.0
  %822 = vmatmul.mubr.f32.gmra.mxu0 %v732
  %v823 = vpop.f32.mrf.mxu0
  %v824 = vadd.f32 0.0, %v823
  %v825 = vpop.f32.mrf.mxu0
  %826 = vmatprep.mubr.f32.mxu0 0.0
  %827 = vmatmul.mubr.f32.gmra.mxu0 %v735
  %v828 = vpop.f32.mrf.mxu0
  %v829 = vadd.f32 0.0, %v828
  %v830 = vpop.f32.mrf.mxu0
  %831 = vmatprep.mubr.f32.mxu0 0.0
  %832 = vmatmul.mubr.f32.gmra.mxu0 %v738
  %v833 = vpop.f32.mrf.mxu0
  %v834 = vadd.f32 0.0, %v833
  %v835 = vpop.f32.mrf.mxu0
  %836 = vmatprep.mubr.f32.mxu0 0.0
  %837 = vmatmul.mubr.f32.gmra.mxu0 %v741
  %v838 = vpop.f32.mrf.mxu0
  %v839 = vadd.f32 0.0, %v838
  %v840 = vpop.f32.mrf.mxu0
  %841 = vmatprep.mubr.f32.mxu0 0.0
  %842 = vmatmul.mubr.f32.gmra.mxu0 %v744
  %v843 = vpop.f32.mrf.mxu0
  %v844 = vadd.f32 0.0, %v843
  %v845 = vpop.f32.mrf.mxu0
  %846 = vmatprep.mubr.f32.mxu0 0.0
  %847 = vmatmul.mubr.f32.gmra.mxu0 %v747
  %v848 = vpop.f32.mrf.mxu0
  %v849 = vadd.f32 0.0, %v848
  %v850 = vpop.f32.mrf.mxu0
  %851 = vmatprep.mubr.f32.mxu0 0.0
  %852 = vmatmul.mubr.f32.gmra.mxu0 %v750
  %v853 = vpop.f32.mrf.mxu0
  %v854 = vadd.f32 0.0, %v853
  %v855 = vpop.f32.mrf.mxu0
  %856 = vdwg.mxu0
  %v857 = vadd.f32 %v690, %v819
  %v858 = vadd.f32 %v695, %v824
  %v859 = vadd.f32 %v700, %v829
  %v860 = vadd.f32 %v705, %v834
  %v861 = vadd.f32 %v710, %v839
  %v862 = vadd.f32 %v715, %v844
  %v863 = vadd.f32 %v720, %v849
  %v864 = vadd.f32 %v725, %v854
  %v865 = vld [vmem:[%s1 + $0x70] sm:$0x1]
  %v866 = vlaneseq
  %v867 = vshrl.u32 %v866, 7
  %v868 = vsub.s32 0, %v867
  %v869 = vrot.slane %v865, %v868
  %v870 = vadd.f32 %v857, %v869
  %v871 = vadd.f32 %v858, %v869
  %v872 = vadd.f32 %v859, %v869
  %v873 = vadd.f32 %v860, %v869
  %v874 = vadd.f32 %v861, %v869
  %v875 = vadd.f32 %v862, %v869
  %v876 = vadd.f32 %v863, %v869
  %v877 = vadd.f32 %v864, %v869
  %v878 = vld [vmem:[%s0 + $0x100] sm:$0xff]
  %v879 = vld [vmem:[%s0 + $0x108] sm:$0xff]
  %v880 = vld [vmem:[%s0 + $0x110] sm:$0xff]
  %v881 = vld [vmem:[%s0 + $0x118] sm:$0xff]
  %v882 = vld [vmem:[%s0 + $0x120] sm:$0xff]
  %v883 = vld [vmem:[%s0 + $0x128] sm:$0xff]
  %v884 = vld [vmem:[%s0 + $0x130] sm:$0xff]
  %v885 = vld [vmem:[%s0 + $0x138] sm:$0xff]
  %v886 = vmul.f32 %v870, %v878
  %v887 = vmul.f32 %v871, %v879
  %v888 = vmul.f32 %v872, %v880
  %v889 = vmul.f32 %v873, %v881
  %v890 = vmul.f32 %v874, %v882
  %v891 = vmul.f32 %v875, %v883
  %v892 = vmul.f32 %v876, %v884
  %v893 = vmul.f32 %v877, %v885
  %v894 = vld [vmem:[%s0 + $0x140] sm:$0xff]
  %v895 = vld [vmem:[%s0 + $0x148] sm:$0xff]
  %v896 = vld [vmem:[%s0 + $0x150] sm:$0xff]
  %v897 = vld [vmem:[%s0 + $0x158] sm:$0xff]
  %v898 = vld [vmem:[%s0 + $0x160] sm:$0xff]
  %v899 = vld [vmem:[%s0 + $0x168] sm:$0xff]
  %v900 = vld [vmem:[%s0 + $0x170] sm:$0xff]
  %v901 = vld [vmem:[%s0 + $0x178] sm:$0xff]
  %v902 = vadd.f32 %v886, %v894
  %v903 = vadd.f32 %v887, %v895
  %v904 = vadd.f32 %v888, %v896
  %v905 = vadd.f32 %v889, %v897
  %v906 = vadd.f32 %v890, %v898
  %v907 = vadd.f32 %v891, %v899
  %v908 = vadd.f32 %v892, %v900
  %v909 = vadd.f32 %v893, %v901
  %v910 = vxor.u32 %v902, 2147483648
  %v911 = vxor.u32 %v903, 2147483648
  %v912 = vxor.u32 %v904, 2147483648
  %v913 = vxor.u32 %v905, 2147483648
  %v914 = vxor.u32 %v906, 2147483648
  %v915 = vxor.u32 %v907, 2147483648
  %v916 = vxor.u32 %v908, 2147483648
  %v917 = vxor.u32 %v909, 2147483648
  %v918 = vmul.f32 %v910, 1.442695
  %v919 = vpow.pop %v918
  %v920 = vmul.f32 %v911, 1.442695
  %v921 = vpow.pop %v920
  %v922 = vmul.f32 %v912, 1.442695
  %v923 = vpow.pop %v922
  %v924 = vmul.f32 %v913, 1.442695
  %v925 = vpow.pop %v924
  %v926 = vmul.f32 %v914, 1.442695
  %v927 = vpow.pop %v926
  %v928 = vmul.f32 %v915, 1.442695
  %v929 = vpow.pop %v928
  %v930 = vmul.f32 %v916, 1.442695
  %v931 = vpow.pop %v930
  %v932 = vmul.f32 %v917, 1.442695
  %v933 = vpow.pop %v932
  %v934 = vadd.f32 %v919, 1.0
  %v935 = vadd.f32 %v921, 1.0
  %v936 = vadd.f32 %v923, 1.0
  %v937 = vadd.f32 %v925, 1.0
  %v938 = vadd.f32 %v927, 1.0
  %v939 = vadd.f32 %v929, 1.0
  %v940 = vadd.f32 %v931, 1.0
  %v941 = vadd.f32 %v933, 1.0
  %v942 = vrcp.pop %v934
  %v943 = vmul.f32 1.0, %v942
  %v944 = vrcp.pop %v935
  %v945 = vmul.f32 1.0, %v944
  %v946 = vrcp.pop %v936
  %v947 = vmul.f32 1.0, %v946
  %v948 = vrcp.pop %v937
  %v949 = vmul.f32 1.0, %v948
  %v950 = vrcp.pop %v938
  %v951 = vmul.f32 1.0, %v950
  %v952 = vrcp.pop %v939
  %v953 = vmul.f32 1.0, %v952
  %v954 = vrcp.pop %v940
  %v955 = vmul.f32 1.0, %v954
  %v956 = vrcp.pop %v941
  %v957 = vmul.f32 1.0, %v956
  %v958 = vmul.f32 %v902, %v943
  %v959 = vmul.f32 %v903, %v945
  %v960 = vmul.f32 %v904, %v947
  %v961 = vmul.f32 %v905, %v949
  %v962 = vmul.f32 %v906, %v951
  %v963 = vmul.f32 %v907, %v953
  %v964 = vmul.f32 %v908, %v955
  %v965 = vmul.f32 %v909, %v957
  %v966 = vld [vmem:[%s1 + $0x78] sm:$0xff]
  %v967 = vld [vmem:[%s1 + $0x80] sm:$0xff]
  %v968 = vld [vmem:[%s1 + $0x88] sm:$0xff]
  %v969 = vld [vmem:[%s1 + $0x90] sm:$0xff]
  %v971 = vsel %vm250, %v958, 0
  %v974 = vsel %vm250, %v959, 0
  %v977 = vsel %vm250, %v960, 0
  %v980 = vsel %vm250, %v961, 0
  %v983 = vsel %vm250, %v962, 0
  %v986 = vsel %vm250, %v963, 0
  %v989 = vsel %vm250, %v964, 0
  %v992 = vsel %vm250, %v965, 0
  %994 = vmatprep.subr.mxu0 0.0
  %995 = vmatpush1.msra.mxu0 0.0
  %996 = vmatprep.subr.mxu0 0.0
  %997 = vmatpush1.msra.mxu0 0.0
  %998 = vmatprep.subr.mxu0 0.0
  %999 = vmatpush1.msra.mxu0 0.0
  %1000 = vmatprep.subr.mxu0 0.0
  %1001 = vmatpush1.msra.mxu0 0.0
  %1002 = vmatprep.subr.mxu0 0.0
  %1003 = vmatpush1.msra.mxu0 0.0
  %1004 = vmatprep.subr.mxu0 0.0
  %1005 = vmatpush1.msra.mxu0 0.0
  %1006 = vmatprep.subr.mxu0 0.0
  %1007 = vmatpush1.msra.mxu0 0.0
  %1008 = vmatprep.subr.mxu0 0.0
  %1009 = vmatpush1.msra.mxu0 0.0
  %1010 = vmatprep.subr.mxu0 0.0
  %1011 = vmatpush1.msra.mxu0 0.0
  %1012 = vmatprep.subr.mxu0 0.0
  %1013 = vmatpush1.msra.mxu0 0.0
  %1014 = vmatprep.subr.mxu0 0.0
  %1015 = vmatpush1.msra.mxu0 0.0
  %1016 = vmatprep.subr.mxu0 0.0
  %1017 = vmatpush1.msra.mxu0 0.0
  %1018 = vmatprep.subr.mxu0 0.0
  %1019 = vmatpush1.msra.mxu0 %v969
  %1020 = vmatprep.subr.mxu0 0.0
  %1021 = vmatpush1.msra.mxu0 %v968
  %1022 = vmatprep.subr.mxu0 0.0
  %1023 = vmatpush1.msra.mxu0 %v967
  %1024 = vmatprep.subr.mxu0 0.0
  %1025 = vmatpush1.msra.mxu0 %v966
  %1026 = vmatprep.subr.mxu0 0.0
  %1027 = vmatpush2.msra.mxu0 0.0
  %1028 = vmatprep.subr.mxu0 0.0
  %1029 = vmatpush2.msra.mxu0 0.0
  %1030 = vmatprep.subr.mxu0 0.0
  %1031 = vmatpush2.msra.mxu0 0.0
  %1032 = vmatprep.subr.mxu0 0.0
  %1033 = vmatpush2.msra.mxu0 0.0
  %1034 = vmatprep.subr.mxu0 0.0
  %1035 = vmatpush2.msra.mxu0 0.0
  %1036 = vmatprep.subr.mxu0 0.0
  %1037 = vmatpush2.msra.mxu0 0.0
  %1038 = vmatprep.subr.mxu0 0.0
  %1039 = vmatpush2.msra.mxu0 0.0
  %1040 = vmatprep.subr.mxu0 0.0
  %1041 = vmatpush2.msra.mxu0 0.0
  %1042 = vmatprep.subr.mxu0 0.0
  %1043 = vmatpush2.msra.mxu0 0.0
  %1044 = vmatprep.subr.mxu0 0.0
  %1045 = vmatpush2.msra.mxu0 0.0
  %1046 = vmatprep.subr.mxu0 0.0
  %1047 = vmatpush2.msra.mxu0 0.0
  %1048 = vmatprep.subr.mxu0 0.0
  %1049 = vmatpush2.msra.mxu0 0.0
  %1050 = vmatprep.subr.mxu0 0.0
  %1051 = vmatpush2.msra.mxu0 0.0
  %1052 = vmatprep.subr.mxu0 0.0
  %1053 = vmatpush2.msra.mxu0 0.0
  %1054 = vmatprep.subr.mxu0 0.0
  %1055 = vmatpush2.msra.mxu0 0.0
  %1056 = vmatprep.subr.mxu0 0.0
  %1057 = vmatpush2.msra.mxu0 0.0
  %1058 = vmatprep.mubr.f32.mxu0 0.0
  %1059 = vmatmul.mubr.f32.gmra.mxu0 %v971
  %v1060 = vpop.f32.mrf.mxu0
  %v1061 = vadd.f32 0.0, %v1060
  %v1062 = vpop.f32.mrf.mxu0
  %1063 = vmatprep.mubr.f32.mxu0 0.0
  %1064 = vmatmul.mubr.f32.gmra.mxu0 %v974
  %v1065 = vpop.f32.mrf.mxu0
  %v1066 = vadd.f32 0.0, %v1065
  %v1067 = vpop.f32.mrf.mxu0
  %1068 = vmatprep.mubr.f32.mxu0 0.0
  %1069 = vmatmul.mubr.f32.gmra.mxu0 %v977
  %v1070 = vpop.f32.mrf.mxu0
  %v1071 = vadd.f32 0.0, %v1070
  %v1072 = vpop.f32.mrf.mxu0
  %1073 = vmatprep.mubr.f32.mxu0 0.0
  %1074 = vmatmul.mubr.f32.gmra.mxu0 %v980
  %v1075 = vpop.f32.mrf.mxu0
  %v1076 = vadd.f32 0.0, %v1075
  %v1077 = vpop.f32.mrf.mxu0
  %1078 = vmatprep.mubr.f32.mxu0 0.0
  %1079 = vmatmul.mubr.f32.gmra.mxu0 %v983
  %v1080 = vpop.f32.mrf.mxu0
  %v1081 = vadd.f32 0.0, %v1080
  %v1082 = vpop.f32.mrf.mxu0
  %1083 = vmatprep.mubr.f32.mxu0 0.0
  %1084 = vmatmul.mubr.f32.gmra.mxu0 %v986
  %v1085 = vpop.f32.mrf.mxu0
  %v1086 = vadd.f32 0.0, %v1085
  %v1087 = vpop.f32.mrf.mxu0
  %1088 = vmatprep.mubr.f32.mxu0 0.0
  %1089 = vmatmul.mubr.f32.gmra.mxu0 %v989
  %v1090 = vpop.f32.mrf.mxu0
  %v1091 = vadd.f32 0.0, %v1090
  %v1092 = vpop.f32.mrf.mxu0
  %1093 = vmatprep.mubr.f32.mxu0 0.0
  %1094 = vmatmul.mubr.f32.gmra.mxu0 %v992
  %v1095 = vpop.f32.mrf.mxu0
  %v1096 = vadd.f32 0.0, %v1095
  %v1097 = vpop.f32.mrf.mxu0
  %1098 = vdwg.mxu0
  %v1099 = vld [vmem:[%s1 + $0x98] sm:$0xff]
  %v1100 = vld [vmem:[%s1 + $0xa0] sm:$0xff]
  %v1101 = vld [vmem:[%s1 + $0xa8] sm:$0xff]
  %v1102 = vld [vmem:[%s1 + $0xb0] sm:$0xff]
  %1103 = vmatprep.subr.mxu0 0.0
  %1104 = vmatpush1.msra.mxu0 0.0
  %1105 = vmatprep.subr.mxu0 0.0
  %1106 = vmatpush1.msra.mxu0 0.0
  %1107 = vmatprep.subr.mxu0 0.0
  %1108 = vmatpush1.msra.mxu0 0.0
  %1109 = vmatprep.subr.mxu0 0.0
  %1110 = vmatpush1.msra.mxu0 0.0
  %1111 = vmatprep.subr.mxu0 0.0
  %1112 = vmatpush1.msra.mxu0 0.0
  %1113 = vmatprep.subr.mxu0 0.0
  %1114 = vmatpush1.msra.mxu0 0.0
  %1115 = vmatprep.subr.mxu0 0.0
  %1116 = vmatpush1.msra.mxu0 0.0
  %1117 = vmatprep.subr.mxu0 0.0
  %1118 = vmatpush1.msra.mxu0 0.0
  %1119 = vmatprep.subr.mxu0 0.0
  %1120 = vmatpush1.msra.mxu0 0.0
  %1121 = vmatprep.subr.mxu0 0.0
  %1122 = vmatpush1.msra.mxu0 0.0
  %1123 = vmatprep.subr.mxu0 0.0
  %1124 = vmatpush1.msra.mxu0 0.0
  %1125 = vmatprep.subr.mxu0 0.0
  %1126 = vmatpush1.msra.mxu0 0.0
  %1127 = vmatprep.subr.mxu0 0.0
  %1128 = vmatpush1.msra.mxu0 %v1102
  %1129 = vmatprep.subr.mxu0 0.0
  %1130 = vmatpush1.msra.mxu0 %v1101
  %1131 = vmatprep.subr.mxu0 0.0
  %1132 = vmatpush1.msra.mxu0 %v1100
  %1133 = vmatprep.subr.mxu0 0.0
  %1134 = vmatpush1.msra.mxu0 %v1099
  %1135 = vmatprep.subr.mxu0 0.0
  %1136 = vmatpush2.msra.mxu0 0.0
  %1137 = vmatprep.subr.mxu0 0.0
  %1138 = vmatpush2.msra.mxu0 0.0
  %1139 = vmatprep.subr.mxu0 0.0
  %1140 = vmatpush2.msra.mxu0 0.0
  %1141 = vmatprep.subr.mxu0 0.0
  %1142 = vmatpush2.msra.mxu0 0.0
  %1143 = vmatprep.subr.mxu0 0.0
  %1144 = vmatpush2.msra.mxu0 0.0
  %1145 = vmatprep.subr.mxu0 0.0
  %1146 = vmatpush2.msra.mxu0 0.0
  %1147 = vmatprep.subr.mxu0 0.0
  %1148 = vmatpush2.msra.mxu0 0.0
  %1149 = vmatprep.subr.mxu0 0.0
  %1150 = vmatpush2.msra.mxu0 0.0
  %1151 = vmatprep.subr.mxu0 0.0
  %1152 = vmatpush2.msra.mxu0 0.0
  %1153 = vmatprep.subr.mxu0 0.0
  %1154 = vmatpush2.msra.mxu0 0.0
  %1155 = vmatprep.subr.mxu0 0.0
  %1156 = vmatpush2.msra.mxu0 0.0
  %1157 = vmatprep.subr.mxu0 0.0
  %1158 = vmatpush2.msra.mxu0 0.0
  %1159 = vmatprep.subr.mxu0 0.0
  %1160 = vmatpush2.msra.mxu0 0.0
  %1161 = vmatprep.subr.mxu0 0.0
  %1162 = vmatpush2.msra.mxu0 0.0
  %1163 = vmatprep.subr.mxu0 0.0
  %1164 = vmatpush2.msra.mxu0 0.0
  %1165 = vmatprep.subr.mxu0 0.0
  %1166 = vmatpush2.msra.mxu0 0.0
  %1167 = vmatprep.mubr.f32.mxu0 0.0
  %1168 = vmatmul.mubr.f32.gmra.mxu0 %v971
  %v1169 = vpop.f32.mrf.mxu0
  %v1170 = vadd.f32 0.0, %v1169
  %v1171 = vpop.f32.mrf.mxu0
  %1172 = vmatprep.mubr.f32.mxu0 0.0
  %1173 = vmatmul.mubr.f32.gmra.mxu0 %v974
  %v1174 = vpop.f32.mrf.mxu0
  %v1175 = vadd.f32 0.0, %v1174
  %v1176 = vpop.f32.mrf.mxu0
  %1177 = vmatprep.mubr.f32.mxu0 0.0
  %1178 = vmatmul.mubr.f32.gmra.mxu0 %v977
  %v1179 = vpop.f32.mrf.mxu0
  %v1180 = vadd.f32 0.0, %v1179
  %v1181 = vpop.f32.mrf.mxu0
  %1182 = vmatprep.mubr.f32.mxu0 0.0
  %1183 = vmatmul.mubr.f32.gmra.mxu0 %v980
  %v1184 = vpop.f32.mrf.mxu0
  %v1185 = vadd.f32 0.0, %v1184
  %v1186 = vpop.f32.mrf.mxu0
  %1187 = vmatprep.mubr.f32.mxu0 0.0
  %1188 = vmatmul.mubr.f32.gmra.mxu0 %v983
  %v1189 = vpop.f32.mrf.mxu0
  %v1190 = vadd.f32 0.0, %v1189
  %v1191 = vpop.f32.mrf.mxu0
  %1192 = vmatprep.mubr.f32.mxu0 0.0
  %1193 = vmatmul.mubr.f32.gmra.mxu0 %v986
  %v1194 = vpop.f32.mrf.mxu0
  %v1195 = vadd.f32 0.0, %v1194
  %v1196 = vpop.f32.mrf.mxu0
  %1197 = vmatprep.mubr.f32.mxu0 0.0
  %1198 = vmatmul.mubr.f32.gmra.mxu0 %v989
  %v1199 = vpop.f32.mrf.mxu0
  %v1200 = vadd.f32 0.0, %v1199
  %v1201 = vpop.f32.mrf.mxu0
  %1202 = vmatprep.mubr.f32.mxu0 0.0
  %1203 = vmatmul.mubr.f32.gmra.mxu0 %v992
  %v1204 = vpop.f32.mrf.mxu0
  %v1205 = vadd.f32 0.0, %v1204
  %v1206 = vpop.f32.mrf.mxu0
  %1207 = vdwg.mxu0
  %v1208 = vld [vmem:[%s1 + $0xb8] sm:$0xff]
  %v1209 = vld [vmem:[%s1 + $0xc0] sm:$0xff]
  %v1210 = vld [vmem:[%s1 + $0xc8] sm:$0xff]
  %v1211 = vld [vmem:[%s1 + $0xd0] sm:$0xff]
  %1212 = vmatprep.subr.mxu0 0.0
  %1213 = vmatpush1.msra.mxu0 0.0
  %1214 = vmatprep.subr.mxu0 0.0
  %1215 = vmatpush1.msra.mxu0 0.0
  %1216 = vmatprep.subr.mxu0 0.0
  %1217 = vmatpush1.msra.mxu0 0.0
  %1218 = vmatprep.subr.mxu0 0.0
  %1219 = vmatpush1.msra.mxu0 0.0
  %1220 = vmatprep.subr.mxu0 0.0
  %1221 = vmatpush1.msra.mxu0 0.0
  %1222 = vmatprep.subr.mxu0 0.0
  %1223 = vmatpush1.msra.mxu0 0.0
  %1224 = vmatprep.subr.mxu0 0.0
  %1225 = vmatpush1.msra.mxu0 0.0
  %1226 = vmatprep.subr.mxu0 0.0
  %1227 = vmatpush1.msra.mxu0 0.0
  %1228 = vmatprep.subr.mxu0 0.0
  %1229 = vmatpush1.msra.mxu0 0.0
  %1230 = vmatprep.subr.mxu0 0.0
  %1231 = vmatpush1.msra.mxu0 0.0
  %1232 = vmatprep.subr.mxu0 0.0
  %1233 = vmatpush1.msra.mxu0 0.0
  %1234 = vmatprep.subr.mxu0 0.0
  %1235 = vmatpush1.msra.mxu0 0.0
  %1236 = vmatprep.subr.mxu0 0.0
  %1237 = vmatpush1.msra.mxu0 %v1211
  %1238 = vmatprep.subr.mxu0 0.0
  %1239 = vmatpush1.msra.mxu0 %v1210
  %1240 = vmatprep.subr.mxu0 0.0
  %1241 = vmatpush1.msra.mxu0 %v1209
  %1242 = vmatprep.subr.mxu0 0.0
  %1243 = vmatpush1.msra.mxu0 %v1208
  %1244 = vmatprep.subr.mxu0 0.0
  %1245 = vmatpush2.msra.mxu0 0.0
  %1246 = vmatprep.subr.mxu0 0.0
  %1247 = vmatpush2.msra.mxu0 0.0
  %1248 = vmatprep.subr.mxu0 0.0
  %1249 = vmatpush2.msra.mxu0 0.0
  %1250 = vmatprep.subr.mxu0 0.0
  %1251 = vmatpush2.msra.mxu0 0.0
  %1252 = vmatprep.subr.mxu0 0.0
  %1253 = vmatpush2.msra.mxu0 0.0
  %1254 = vmatprep.subr.mxu0 0.0
  %1255 = vmatpush2.msra.mxu0 0.0
  %1256 = vmatprep.subr.mxu0 0.0
  %1257 = vmatpush2.msra.mxu0 0.0
  %1258 = vmatprep.subr.mxu0 0.0
  %1259 = vmatpush2.msra.mxu0 0.0
  %1260 = vmatprep.subr.mxu0 0.0
  %1261 = vmatpush2.msra.mxu0 0.0
  %1262 = vmatprep.subr.mxu0 0.0
  %1263 = vmatpush2.msra.mxu0 0.0
  %1264 = vmatprep.subr.mxu0 0.0
  %1265 = vmatpush2.msra.mxu0 0.0
  %1266 = vmatprep.subr.mxu0 0.0
  %1267 = vmatpush2.msra.mxu0 0.0
  %1268 = vmatprep.subr.mxu0 0.0
  %1269 = vmatpush2.msra.mxu0 0.0
  %1270 = vmatprep.subr.mxu0 0.0
  %1271 = vmatpush2.msra.mxu0 0.0
  %1272 = vmatprep.subr.mxu0 0.0
  %1273 = vmatpush2.msra.mxu0 0.0
  %1274 = vmatprep.subr.mxu0 0.0
  %1275 = vmatpush2.msra.mxu0 0.0
  %1276 = vmatprep.mubr.f32.mxu0 0.0
  %1277 = vmatmul.mubr.f32.gmra.mxu0 %v971
  %v1278 = vpop.f32.mrf.mxu0
  %v1279 = vadd.f32 0.0, %v1278
  %v1280 = vpop.f32.mrf.mxu0
  %1281 = vmatprep.mubr.f32.mxu0 0.0
  %1282 = vmatmul.mubr.f32.gmra.mxu0 %v974
  %v1283 = vpop.f32.mrf.mxu0
  %v1284 = vadd.f32 0.0, %v1283
  %v1285 = vpop.f32.mrf.mxu0
  %1286 = vmatprep.mubr.f32.mxu0 0.0
  %1287 = vmatmul.mubr.f32.gmra.mxu0 %v977
  %v1288 = vpop.f32.mrf.mxu0
  %v1289 = vadd.f32 0.0, %v1288
  %v1290 = vpop.f32.mrf.mxu0
  %1291 = vmatprep.mubr.f32.mxu0 0.0
  %1292 = vmatmul.mubr.f32.gmra.mxu0 %v980
  %v1293 = vpop.f32.mrf.mxu0
  %v1294 = vadd.f32 0.0, %v1293
  %v1295 = vpop.f32.mrf.mxu0
  %1296 = vmatprep.mubr.f32.mxu0 0.0
  %1297 = vmatmul.mubr.f32.gmra.mxu0 %v983
  %v1298 = vpop.f32.mrf.mxu0
  %v1299 = vadd.f32 0.0, %v1298
  %v1300 = vpop.f32.mrf.mxu0
  %1301 = vmatprep.mubr.f32.mxu0 0.0
  %1302 = vmatmul.mubr.f32.gmra.mxu0 %v986
  %v1303 = vpop.f32.mrf.mxu0
  %v1304 = vadd.f32 0.0, %v1303
  %v1305 = vpop.f32.mrf.mxu0
  %1306 = vmatprep.mubr.f32.mxu0 0.0
  %1307 = vmatmul.mubr.f32.gmra.mxu0 %v989
  %v1308 = vpop.f32.mrf.mxu0
  %v1309 = vadd.f32 0.0, %v1308
  %v1310 = vpop.f32.mrf.mxu0
  %1311 = vmatprep.mubr.f32.mxu0 0.0
  %1312 = vmatmul.mubr.f32.gmra.mxu0 %v992
  %v1313 = vpop.f32.mrf.mxu0
  %v1314 = vadd.f32 0.0, %v1313
  %v1315 = vpop.f32.mrf.mxu0
  %1316 = vdwg.mxu0
  %1317 = vmatprep.subr.mxu0 0.0
  %1318 = vmatpush1.msra.mxu0 0.0
  %1319 = vmatprep.subr.mxu0 0.0
  %1320 = vmatpush1.msra.mxu0 0.0
  %1321 = vmatprep.subr.mxu0 0.0
  %1322 = vmatpush1.msra.mxu0 0.0
  %1323 = vmatprep.subr.mxu0 0.0
  %1324 = vmatpush1.msra.mxu0 0.0
  %1325 = vmatprep.subr.mxu0 0.0
  %1326 = vmatpush1.msra.mxu0 0.0
  %1327 = vmatprep.subr.mxu0 0.0
  %1328 = vmatpush1.msra.mxu0 0.0
  %1329 = vmatprep.subr.mxu0 0.0
  %1330 = vmatpush1.msra.mxu0 0.0
  %1331 = vmatprep.subr.mxu0 0.0
  %1332 = vmatpush1.msra.mxu0 0.0
  %1333 = vmatprep.subr.mxu0 0.0
  %1334 = vmatpush1.msra.mxu0 %v1096
  %1335 = vmatprep.subr.mxu0 0.0
  %1336 = vmatpush1.msra.mxu0 %v1091
  %1337 = vmatprep.subr.mxu0 0.0
  %1338 = vmatpush1.msra.mxu0 %v1086
  %1339 = vmatprep.subr.mxu0 0.0
  %1340 = vmatpush1.msra.mxu0 %v1081
  %1341 = vmatprep.subr.mxu0 0.0
  %1342 = vmatpush1.msra.mxu0 %v1076
  %1343 = vmatprep.subr.mxu0 0.0
  %1344 = vmatpush1.msra.mxu0 %v1071
  %1345 = vmatprep.subr.mxu0 0.0
  %1346 = vmatpush1.msra.mxu0 %v1066
  %1347 = vmatprep.subr.mxu0 0.0
  %1348 = vmatpush1.msra.mxu0 %v1061
  %1349 = vmatprep.subr.mxu0 0.0
  %1350 = vmatpush2.msra.mxu0 0.0
  %1351 = vmatprep.subr.mxu0 0.0
  %1352 = vmatpush2.msra.mxu0 0.0
  %1353 = vmatprep.subr.mxu0 0.0
  %1354 = vmatpush2.msra.mxu0 0.0
  %1355 = vmatprep.subr.mxu0 0.0
  %1356 = vmatpush2.msra.mxu0 0.0
  %1357 = vmatprep.subr.mxu0 0.0
  %1358 = vmatpush2.msra.mxu0 0.0
  %1359 = vmatprep.subr.mxu0 0.0
  %1360 = vmatpush2.msra.mxu0 0.0
  %1361 = vmatprep.subr.mxu0 0.0
  %1362 = vmatpush2.msra.mxu0 0.0
  %1363 = vmatprep.subr.mxu0 0.0
  %1364 = vmatpush2.msra.mxu0 0.0
  %1365 = vmatprep.subr.mxu0 0.0
  %1366 = vmatpush2.msra.mxu0 0.0
  %1367 = vmatprep.subr.mxu0 0.0
  %1368 = vmatpush2.msra.mxu0 0.0
  %1369 = vmatprep.subr.mxu0 0.0
  %1370 = vmatpush2.msra.mxu0 0.0
  %1371 = vmatprep.subr.mxu0 0.0
  %1372 = vmatpush2.msra.mxu0 0.0
  %1373 = vmatprep.subr.mxu0 0.0
  %1374 = vmatpush2.msra.mxu0 0.0
  %1375 = vmatprep.subr.mxu0 0.0
  %1376 = vmatpush2.msra.mxu0 0.0
  %1377 = vmatprep.subr.mxu0 0.0
  %1378 = vmatpush2.msra.mxu0 0.0
  %1379 = vmatprep.subr.mxu0 0.0
  %1380 = vmatpush2.msra.mxu0 0.0
  %1381 = vmatprep.mubr.f32.mxu0 0.0
  %1382 = vmatmul.mubr.f32.gmra.mxu0 %v600
  %v1383 = vpop.f32.mrf.mxu0
  %v1384 = vadd.f32 %v1170, %v1383
  %v1385 = vpop.f32.mrf.mxu0
  %1386 = vmatprep.mubr.f32.mxu0 0.0
  %1387 = vmatmul.mubr.f32.gmra.mxu0 %v603
  %v1388 = vpop.f32.mrf.mxu0
  %v1389 = vadd.f32 %v1175, %v1388
  %v1390 = vpop.f32.mrf.mxu0
  %1391 = vmatprep.mubr.f32.mxu0 0.0
  %1392 = vmatmul.mubr.f32.gmra.mxu0 %v606
  %v1393 = vpop.f32.mrf.mxu0
  %v1394 = vadd.f32 %v1180, %v1393
  %v1395 = vpop.f32.mrf.mxu0
  %1396 = vmatprep.mubr.f32.mxu0 0.0
  %1397 = vmatmul.mubr.f32.gmra.mxu0 %v609
  %v1398 = vpop.f32.mrf.mxu0
  %v1399 = vadd.f32 %v1185, %v1398
  %v1400 = vpop.f32.mrf.mxu0
  %1401 = vmatprep.mubr.f32.mxu0 0.0
  %1402 = vmatmul.mubr.f32.gmra.mxu0 %v612
  %v1403 = vpop.f32.mrf.mxu0
  %v1404 = vadd.f32 %v1190, %v1403
  %v1405 = vpop.f32.mrf.mxu0
  %1406 = vmatprep.mubr.f32.mxu0 0.0
  %1407 = vmatmul.mubr.f32.gmra.mxu0 %v615
  %v1408 = vpop.f32.mrf.mxu0
  %v1409 = vadd.f32 %v1195, %v1408
  %v1410 = vpop.f32.mrf.mxu0
  %1411 = vmatprep.mubr.f32.mxu0 0.0
  %1412 = vmatmul.mubr.f32.gmra.mxu0 %v618
  %v1413 = vpop.f32.mrf.mxu0
  %v1414 = vadd.f32 %v1200, %v1413
  %v1415 = vpop.f32.mrf.mxu0
  %1416 = vmatprep.mubr.f32.mxu0 0.0
  %1417 = vmatmul.mubr.f32.gmra.mxu0 %v621
  %v1418 = vpop.f32.mrf.mxu0
  %v1419 = vadd.f32 %v1205, %v1418
  %v1420 = vpop.f32.mrf.mxu0
  %1421 = vdwg.mxu0
  %1422 = vmatprep.subr.mxu0 0.0
  %1423 = vmatpush1.msra.mxu0 0.0
  %1424 = vmatprep.subr.mxu0 0.0
  %1425 = vmatpush1.msra.mxu0 0.0
  %1426 = vmatprep.subr.mxu0 0.0
  %1427 = vmatpush1.msra.mxu0 0.0
  %1428 = vmatprep.subr.mxu0 0.0
  %1429 = vmatpush1.msra.mxu0 0.0
  %1430 = vmatprep.subr.mxu0 0.0
  %1431 = vmatpush1.msra.mxu0 0.0
  %1432 = vmatprep.subr.mxu0 0.0
  %1433 = vmatpush1.msra.mxu0 0.0
  %1434 = vmatprep.subr.mxu0 0.0
  %1435 = vmatpush1.msra.mxu0 0.0
  %1436 = vmatprep.subr.mxu0 0.0
  %1437 = vmatpush1.msra.mxu0 0.0
  %1438 = vmatprep.subr.mxu0 0.0
  %1439 = vmatpush1.msra.mxu0 %v1314
  %1440 = vmatprep.subr.mxu0 0.0
  %1441 = vmatpush1.msra.mxu0 %v1309
  %1442 = vmatprep.subr.mxu0 0.0
  %1443 = vmatpush1.msra.mxu0 %v1304
  %1444 = vmatprep.subr.mxu0 0.0
  %1445 = vmatpush1.msra.mxu0 %v1299
  %1446 = vmatprep.subr.mxu0 0.0
  %1447 = vmatpush1.msra.mxu0 %v1294
  %1448 = vmatprep.subr.mxu0 0.0
  %1449 = vmatpush1.msra.mxu0 %v1289
  %1450 = vmatprep.subr.mxu0 0.0
  %1451 = vmatpush1.msra.mxu0 %v1284
  %1452 = vmatprep.subr.mxu0 0.0
  %1453 = vmatpush1.msra.mxu0 %v1279
  %1454 = vmatprep.subr.mxu0 0.0
  %1455 = vmatpush2.msra.mxu0 0.0
  %1456 = vmatprep.subr.mxu0 0.0
  %1457 = vmatpush2.msra.mxu0 0.0
  %1458 = vmatprep.subr.mxu0 0.0
  %1459 = vmatpush2.msra.mxu0 0.0
  %1460 = vmatprep.subr.mxu0 0.0
  %1461 = vmatpush2.msra.mxu0 0.0
  %1462 = vmatprep.subr.mxu0 0.0
  %1463 = vmatpush2.msra.mxu0 0.0
  %1464 = vmatprep.subr.mxu0 0.0
  %1465 = vmatpush2.msra.mxu0 0.0
  %1466 = vmatprep.subr.mxu0 0.0
  %1467 = vmatpush2.msra.mxu0 0.0
  %1468 = vmatprep.subr.mxu0 0.0
  %1469 = vmatpush2.msra.mxu0 0.0
  %1470 = vmatprep.subr.mxu0 0.0
  %1471 = vmatpush2.msra.mxu0 0.0
  %1472 = vmatprep.subr.mxu0 0.0
  %1473 = vmatpush2.msra.mxu0 0.0
  %1474 = vmatprep.subr.mxu0 0.0
  %1475 = vmatpush2.msra.mxu0 0.0
  %1476 = vmatprep.subr.mxu0 0.0
  %1477 = vmatpush2.msra.mxu0 0.0
  %1478 = vmatprep.subr.mxu0 0.0
  %1479 = vmatpush2.msra.mxu0 0.0
  %1480 = vmatprep.subr.mxu0 0.0
  %1481 = vmatpush2.msra.mxu0 0.0
  %1482 = vmatprep.subr.mxu0 0.0
  %1483 = vmatpush2.msra.mxu0 0.0
  %1484 = vmatprep.subr.mxu0 0.0
  %1485 = vmatpush2.msra.mxu0 0.0
  %1486 = vmatprep.mubr.f32.mxu0 0.0
  %1487 = vmatmul.mubr.f32.gmra.mxu0 %v729
  %v1488 = vpop.f32.mrf.mxu0
  %v1489 = vadd.f32 0.0, %v1488
  %v1490 = vpop.f32.mrf.mxu0
  %1491 = vmatprep.mubr.f32.mxu0 0.0
  %1492 = vmatmul.mubr.f32.gmra.mxu0 %v732
  %v1493 = vpop.f32.mrf.mxu0
  %v1494 = vadd.f32 0.0, %v1493
  %v1495 = vpop.f32.mrf.mxu0
  %1496 = vmatprep.mubr.f32.mxu0 0.0
  %1497 = vmatmul.mubr.f32.gmra.mxu0 %v735
  %v1498 = vpop.f32.mrf.mxu0
  %v1499 = vadd.f32 0.0, %v1498
  %v1500 = vpop.f32.mrf.mxu0
  %1501 = vmatprep.mubr.f32.mxu0 0.0
  %1502 = vmatmul.mubr.f32.gmra.mxu0 %v738
  %v1503 = vpop.f32.mrf.mxu0
  %v1504 = vadd.f32 0.0, %v1503
  %v1505 = vpop.f32.mrf.mxu0
  %1506 = vmatprep.mubr.f32.mxu0 0.0
  %1507 = vmatmul.mubr.f32.gmra.mxu0 %v741
  %v1508 = vpop.f32.mrf.mxu0
  %v1509 = vadd.f32 0.0, %v1508
  %v1510 = vpop.f32.mrf.mxu0
  %1511 = vmatprep.mubr.f32.mxu0 0.0
  %1512 = vmatmul.mubr.f32.gmra.mxu0 %v744
  %v1513 = vpop.f32.mrf.mxu0
  %v1514 = vadd.f32 0.0, %v1513
  %v1515 = vpop.f32.mrf.mxu0
  %1516 = vmatprep.mubr.f32.mxu0 0.0
  %1517 = vmatmul.mubr.f32.gmra.mxu0 %v747
  %v1518 = vpop.f32.mrf.mxu0
  %v1519 = vadd.f32 0.0, %v1518
  %v1520 = vpop.f32.mrf.mxu0
  %1521 = vmatprep.mubr.f32.mxu0 0.0
  %1522 = vmatmul.mubr.f32.gmra.mxu0 %v750
  %v1523 = vpop.f32.mrf.mxu0
  %v1524 = vadd.f32 0.0, %v1523
  %v1525 = vpop.f32.mrf.mxu0
  %1526 = vdwg.mxu0
  %v1527 = vadd.f32 %v1384, %v1489
  %v1528 = vadd.f32 %v1389, %v1494
  %v1529 = vadd.f32 %v1394, %v1499
  %v1530 = vadd.f32 %v1399, %v1504
  %v1531 = vadd.f32 %v1404, %v1509
  %v1532 = vadd.f32 %v1409, %v1514
  %v1533 = vadd.f32 %v1414, %v1519
  %v1534 = vadd.f32 %v1419, %v1524
  %v1535 = vld [vmem:[%s1 + $0xd8] sm:$0x1]
  %v1536 = vlaneseq
  %v1537 = vshrl.u32 %v1536, 7
  %v1538 = vsub.s32 0, %v1537
  %v1539 = vrot.slane %v1535, %v1538
  %v1540 = vadd.f32 %v1527, %v1539
  %v1541 = vadd.f32 %v1528, %v1539
  %v1542 = vadd.f32 %v1529, %v1539
  %v1543 = vadd.f32 %v1530, %v1539
  %v1544 = vadd.f32 %v1531, %v1539
  %v1545 = vadd.f32 %v1532, %v1539
  %v1546 = vadd.f32 %v1533, %v1539
  %v1547 = vadd.f32 %v1534, %v1539
  %v1548 = vadd.f32 %v1540, %v192
  %v1549 = vadd.f32 %v1541, %v197
  %v1550 = vadd.f32 %v1542, %v202
  %v1551 = vadd.f32 %v1543, %v207
  %v1552 = vadd.f32 %v1544, %v212
  %v1553 = vadd.f32 %v1545, %v217
  %v1554 = vadd.f32 %v1546, %v222
  %v1555 = vadd.f32 %v1547, %v227
  %v1556 = vld [vmem:[%s1 + $0xe0] sm:$0xff]
  %v1557 = vld [vmem:[%s1 + $0xe8] sm:$0xff]
  %v1558 = vld [vmem:[%s1 + $0xf0] sm:$0xff]
  %v1559 = vld [vmem:[%s1 + $0xf8] sm:$0xff]
  %v1561 = vsel %vm250, %v1548, 0
  %v1564 = vsel %vm250, %v1549, 0
  %v1567 = vsel %vm250, %v1550, 0
  %v1570 = vsel %vm250, %v1551, 0
  %v1573 = vsel %vm250, %v1552, 0
  %v1576 = vsel %vm250, %v1553, 0
  %v1579 = vsel %vm250, %v1554, 0
  %v1582 = vsel %vm250, %v1555, 0
  %1584 = vmatprep.subr.mxu0 0.0
  %1585 = vmatpush1.msra.mxu0 0.0
  %1586 = vmatprep.subr.mxu0 0.0
  %1587 = vmatpush1.msra.mxu0 0.0
  %1588 = vmatprep.subr.mxu0 0.0
  %1589 = vmatpush1.msra.mxu0 0.0
  %1590 = vmatprep.subr.mxu0 0.0
  %1591 = vmatpush1.msra.mxu0 0.0
  %1592 = vmatprep.subr.mxu0 0.0
  %1593 = vmatpush1.msra.mxu0 0.0
  %1594 = vmatprep.subr.mxu0 0.0
  %1595 = vmatpush1.msra.mxu0 0.0
  %1596 = vmatprep.subr.mxu0 0.0
  %1597 = vmatpush1.msra.mxu0 0.0
  %1598 = vmatprep.subr.mxu0 0.0
  %1599 = vmatpush1.msra.mxu0 0.0
  %1600 = vmatprep.subr.mxu0 0.0
  %1601 = vmatpush1.msra.mxu0 0.0
  %1602 = vmatprep.subr.mxu0 0.0
  %1603 = vmatpush1.msra.mxu0 0.0
  %1604 = vmatprep.subr.mxu0 0.0
  %1605 = vmatpush1.msra.mxu0 0.0
  %1606 = vmatprep.subr.mxu0 0.0
  %1607 = vmatpush1.msra.mxu0 0.0
  %1608 = vmatprep.subr.mxu0 0.0
  %1609 = vmatpush1.msra.mxu0 %v1559
  %1610 = vmatprep.subr.mxu0 0.0
  %1611 = vmatpush1.msra.mxu0 %v1558
  %1612 = vmatprep.subr.mxu0 0.0
  %1613 = vmatpush1.msra.mxu0 %v1557
  %1614 = vmatprep.subr.mxu0 0.0
  %1615 = vmatpush1.msra.mxu0 %v1556
  %1616 = vmatprep.subr.mxu0 0.0
  %1617 = vmatpush2.msra.mxu0 0.0
  %1618 = vmatprep.subr.mxu0 0.0
  %1619 = vmatpush2.msra.mxu0 0.0
  %1620 = vmatprep.subr.mxu0 0.0
  %1621 = vmatpush2.msra.mxu0 0.0
  %1622 = vmatprep.subr.mxu0 0.0
  %1623 = vmatpush2.msra.mxu0 0.0
  %1624 = vmatprep.subr.mxu0 0.0
  %1625 = vmatpush2.msra.mxu0 0.0
  %1626 = vmatprep.subr.mxu0 0.0
  %1627 = vmatpush2.msra.mxu0 0.0
  %1628 = vmatprep.subr.mxu0 0.0
  %1629 = vmatpush2.msra.mxu0 0.0
  %1630 = vmatprep.subr.mxu0 0.0
  %1631 = vmatpush2.msra.mxu0 0.0
  %1632 = vmatprep.subr.mxu0 0.0
  %1633 = vmatpush2.msra.mxu0 0.0
  %1634 = vmatprep.subr.mxu0 0.0
  %1635 = vmatpush2.msra.mxu0 0.0
  %1636 = vmatprep.subr.mxu0 0.0
  %1637 = vmatpush2.msra.mxu0 0.0
  %1638 = vmatprep.subr.mxu0 0.0
  %1639 = vmatpush2.msra.mxu0 0.0
  %1640 = vmatprep.subr.mxu0 0.0
  %1641 = vmatpush2.msra.mxu0 0.0
  %1642 = vmatprep.subr.mxu0 0.0
  %1643 = vmatpush2.msra.mxu0 0.0
  %1644 = vmatprep.subr.mxu0 0.0
  %1645 = vmatpush2.msra.mxu0 0.0
  %1646 = vmatprep.subr.mxu0 0.0
  %1647 = vmatpush2.msra.mxu0 0.0
  %1648 = vmatprep.mubr.f32.mxu0 0.0
  %1649 = vmatmul.mubr.f32.gmra.mxu0 %v1561
  %v1650 = vpop.f32.mrf.mxu0
  %v1651 = vadd.f32 0.0, %v1650
  %v1652 = vpop.f32.mrf.mxu0
  %1653 = vmatprep.mubr.f32.mxu0 0.0
  %1654 = vmatmul.mubr.f32.gmra.mxu0 %v1564
  %v1655 = vpop.f32.mrf.mxu0
  %v1656 = vadd.f32 0.0, %v1655
  %v1657 = vpop.f32.mrf.mxu0
  %1658 = vmatprep.mubr.f32.mxu0 0.0
  %1659 = vmatmul.mubr.f32.gmra.mxu0 %v1567
  %v1660 = vpop.f32.mrf.mxu0
  %v1661 = vadd.f32 0.0, %v1660
  %v1662 = vpop.f32.mrf.mxu0
  %1663 = vmatprep.mubr.f32.mxu0 0.0
  %1664 = vmatmul.mubr.f32.gmra.mxu0 %v1570
  %v1665 = vpop.f32.mrf.mxu0
  %v1666 = vadd.f32 0.0, %v1665
  %v1667 = vpop.f32.mrf.mxu0
  %1668 = vmatprep.mubr.f32.mxu0 0.0
  %1669 = vmatmul.mubr.f32.gmra.mxu0 %v1573
  %v1670 = vpop.f32.mrf.mxu0
  %v1671 = vadd.f32 0.0, %v1670
  %v1672 = vpop.f32.mrf.mxu0
  %1673 = vmatprep.mubr.f32.mxu0 0.0
  %1674 = vmatmul.mubr.f32.gmra.mxu0 %v1576
  %v1675 = vpop.f32.mrf.mxu0
  %v1676 = vadd.f32 0.0, %v1675
  %v1677 = vpop.f32.mrf.mxu0
  %1678 = vmatprep.mubr.f32.mxu0 0.0
  %1679 = vmatmul.mubr.f32.gmra.mxu0 %v1579
  %v1680 = vpop.f32.mrf.mxu0
  %v1681 = vadd.f32 0.0, %v1680
  %v1682 = vpop.f32.mrf.mxu0
  %1683 = vmatprep.mubr.f32.mxu0 0.0
  %1684 = vmatmul.mubr.f32.gmra.mxu0 %v1582
  %v1685 = vpop.f32.mrf.mxu0
  %v1686 = vadd.f32 0.0, %v1685
  %v1687 = vpop.f32.mrf.mxu0
  %1688 = vdwg.mxu0
  %v1689 = vld [vmem:[%s1 + $0x100] sm:$0xff]
  %v1690 = vld [vmem:[%s1 + $0x108] sm:$0xff]
  %v1691 = vld [vmem:[%s1 + $0x110] sm:$0xff]
  %v1692 = vld [vmem:[%s1 + $0x118] sm:$0xff]
  %v1693 = vld [vmem:[%s2] sm:$0xff]
  %v1694 = vld [vmem:[%s2 + $0x8] sm:$0xff]
  %v1695 = vld [vmem:[%s2 + $0x10] sm:$0xff]
  %v1696 = vld [vmem:[%s2 + $0x18] sm:$0xff]
  %v1698 = vsel %vm250, %v1689, 0
  %v1701 = vsel %vm250, %v1690, 0
  %v1704 = vsel %vm250, %v1691, 0
  %v1707 = vsel %vm250, %v1692, 0
  %1709 = vmatprep.subr.mxu0 0.0
  %1710 = vmatpush1.msra.mxu0 0.0
  %1711 = vmatprep.subr.mxu0 0.0
  %1712 = vmatpush1.msra.mxu0 0.0
  %1713 = vmatprep.subr.mxu0 0.0
  %1714 = vmatpush1.msra.mxu0 0.0
  %1715 = vmatprep.subr.mxu0 0.0
  %1716 = vmatpush1.msra.mxu0 0.0
  %1717 = vmatprep.subr.mxu0 0.0
  %1718 = vmatpush1.msra.mxu0 0.0
  %1719 = vmatprep.subr.mxu0 0.0
  %1720 = vmatpush1.msra.mxu0 0.0
  %1721 = vmatprep.subr.mxu0 0.0
  %1722 = vmatpush1.msra.mxu0 0.0
  %1723 = vmatprep.subr.mxu0 0.0
  %1724 = vmatpush1.msra.mxu0 0.0
  %1725 = vmatprep.subr.mxu0 0.0
  %1726 = vmatpush1.msra.mxu0 0.0
  %1727 = vmatprep.subr.mxu0 0.0
  %1728 = vmatpush1.msra.mxu0 0.0
  %1729 = vmatprep.subr.mxu0 0.0
  %1730 = vmatpush1.msra.mxu0 0.0
  %1731 = vmatprep.subr.mxu0 0.0
  %1732 = vmatpush1.msra.mxu0 0.0
  %1733 = vmatprep.subr.mxu0 0.0
  %1734 = vmatpush1.msra.mxu0 %v1696
  %1735 = vmatprep.subr.mxu0 0.0
  %1736 = vmatpush1.msra.mxu0 %v1695
  %1737 = vmatprep.subr.mxu0 0.0
  %1738 = vmatpush1.msra.mxu0 %v1694
  %1739 = vmatprep.subr.mxu0 0.0
  %1740 = vmatpush1.msra.mxu0 %v1693
  %1741 = vmatprep.subr.mxu0 0.0
  %1742 = vmatpush2.msra.mxu0 0.0
  %1743 = vmatprep.subr.mxu0 0.0
  %1744 = vmatpush2.msra.mxu0 0.0
  %1745 = vmatprep.subr.mxu0 0.0
  %1746 = vmatpush2.msra.mxu0 0.0
  %1747 = vmatprep.subr.mxu0 0.0
  %1748 = vmatpush2.msra.mxu0 0.0
  %1749 = vmatprep.subr.mxu0 0.0
  %1750 = vmatpush2.msra.mxu0 0.0
  %1751 = vmatprep.subr.mxu0 0.0
  %1752 = vmatpush2.msra.mxu0 0.0
  %1753 = vmatprep.subr.mxu0 0.0
  %1754 = vmatpush2.msra.mxu0 0.0
  %1755 = vmatprep.subr.mxu0 0.0
  %1756 = vmatpush2.msra.mxu0 0.0
  %1757 = vmatprep.subr.mxu0 0.0
  %1758 = vmatpush2.msra.mxu0 0.0
  %1759 = vmatprep.subr.mxu0 0.0
  %1760 = vmatpush2.msra.mxu0 0.0
  %1761 = vmatprep.subr.mxu0 0.0
  %1762 = vmatpush2.msra.mxu0 0.0
  %1763 = vmatprep.subr.mxu0 0.0
  %1764 = vmatpush2.msra.mxu0 0.0
  %1765 = vmatprep.subr.mxu0 0.0
  %1766 = vmatpush2.msra.mxu0 0.0
  %1767 = vmatprep.subr.mxu0 0.0
  %1768 = vmatpush2.msra.mxu0 0.0
  %1769 = vmatprep.subr.mxu0 0.0
  %1770 = vmatpush2.msra.mxu0 0.0
  %1771 = vmatprep.subr.mxu0 0.0
  %1772 = vmatpush2.msra.mxu0 0.0
  %1773 = vmatprep.mubr.f32.mxu0 0.0
  %1774 = vmatmul.mubr.f32.gmra.mxu0 %v1698
  %v1775 = vpop.f32.mrf.mxu0
  %v1776 = vadd.f32 0.0, %v1775
  %v1777 = vpop.f32.mrf.mxu0
  %1778 = vmatprep.mubr.f32.mxu0 0.0
  %1779 = vmatmul.mubr.f32.gmra.mxu0 %v1701
  %v1780 = vpop.f32.mrf.mxu0
  %v1781 = vadd.f32 0.0, %v1780
  %v1782 = vpop.f32.mrf.mxu0
  %1783 = vmatprep.mubr.f32.mxu0 0.0
  %1784 = vmatmul.mubr.f32.gmra.mxu0 %v1704
  %v1785 = vpop.f32.mrf.mxu0
  %v1786 = vadd.f32 0.0, %v1785
  %v1787 = vpop.f32.mrf.mxu0
  %1788 = vmatprep.mubr.f32.mxu0 0.0
  %1789 = vmatmul.mubr.f32.gmra.mxu0 %v1707
  %v1790 = vpop.f32.mrf.mxu0
  %v1791 = vadd.f32 0.0, %v1790
  %v1792 = vpop.f32.mrf.mxu0
  %1793 = vdwg.mxu0
  %v1794 = vld [vmem:[%s2 + $0x20] sm:$0xff]
  %v1795 = vld [vmem:[%s2 + $0x28] sm:$0xff]
  %v1796 = vld [vmem:[%s2 + $0x30] sm:$0xff]
  %v1797 = vld [vmem:[%s2 + $0x38] sm:$0xff]
  %v1798 = vmul.f32 %v1776, %v1794
  %v1799 = vmul.f32 %v1781, %v1795
  %v1800 = vmul.f32 %v1786, %v1796
  %v1801 = vmul.f32 %v1791, %v1797
  %v1802 = vld [vmem:[%s2 + $0x40] sm:$0xff]
  %v1803 = vld [vmem:[%s2 + $0x48] sm:$0xff]
  %v1804 = vld [vmem:[%s2 + $0x50] sm:$0xff]
  %v1805 = vld [vmem:[%s2 + $0x58] sm:$0xff]
  %v1806 = vld [vmem:[%s2 + $0x60] sm:$0xff]
  %v1807 = vld [vmem:[%s2 + $0x68] sm:$0xff]
  %v1808 = vld [vmem:[%s2 + $0x70] sm:$0xff]
  %v1809 = vld [vmem:[%s2 + $0x78] sm:$0xff]
  %v1811 = vsel %vm250, %v1651, 0
  %v1814 = vsel %vm250, %v1656, 0
  %v1817 = vsel %vm250, %v1661, 0
  %v1820 = vsel %vm250, %v1666, 0
  %v1823 = vsel %vm250, %v1671, 0
  %v1826 = vsel %vm250, %v1676, 0
  %v1829 = vsel %vm250, %v1681, 0
  %v1832 = vsel %vm250, %v1686, 0
  %1834 = vmatprep.subr.mxu0 0.0
  %1835 = vmatpush1.msra.mxu0 0.0
  %1836 = vmatprep.subr.mxu0 0.0
  %1837 = vmatpush1.msra.mxu0 0.0
  %1838 = vmatprep.subr.mxu0 0.0
  %1839 = vmatpush1.msra.mxu0 0.0
  %1840 = vmatprep.subr.mxu0 0.0
  %1841 = vmatpush1.msra.mxu0 0.0
  %1842 = vmatprep.subr.mxu0 0.0
  %1843 = vmatpush1.msra.mxu0 0.0
  %1844 = vmatprep.subr.mxu0 0.0
  %1845 = vmatpush1.msra.mxu0 0.0
  %1846 = vmatprep.subr.mxu0 0.0
  %1847 = vmatpush1.msra.mxu0 0.0
  %1848 = vmatprep.subr.mxu0 0.0
  %1849 = vmatpush1.msra.mxu0 0.0
  %1850 = vmatprep.subr.mxu0 0.0
  %1851 = vmatpush1.msra.mxu0 0.0
  %1852 = vmatprep.subr.mxu0 0.0
  %1853 = vmatpush1.msra.mxu0 0.0
  %1854 = vmatprep.subr.mxu0 0.0
  %1855 = vmatpush1.msra.mxu0 0.0
  %1856 = vmatprep.subr.mxu0 0.0
  %1857 = vmatpush1.msra.mxu0 0.0
  %1858 = vmatprep.subr.mxu0 0.0
  %1859 = vmatpush1.msra.mxu0 %v1801
  %1860 = vmatprep.subr.mxu0 0.0
  %1861 = vmatpush1.msra.mxu0 %v1800
  %1862 = vmatprep.subr.mxu0 0.0
  %1863 = vmatpush1.msra.mxu0 %v1799
  %1864 = vmatprep.subr.mxu0 0.0
  %1865 = vmatpush1.msra.mxu0 %v1798
  %1866 = vmatprep.subr.mxu0 0.0
  %1867 = vmatpush2.msra.mxu0 0.0
  %1868 = vmatprep.subr.mxu0 0.0
  %1869 = vmatpush2.msra.mxu0 0.0
  %1870 = vmatprep.subr.mxu0 0.0
  %1871 = vmatpush2.msra.mxu0 0.0
  %1872 = vmatprep.subr.mxu0 0.0
  %1873 = vmatpush2.msra.mxu0 0.0
  %1874 = vmatprep.subr.mxu0 0.0
  %1875 = vmatpush2.msra.mxu0 0.0
  %1876 = vmatprep.subr.mxu0 0.0
  %1877 = vmatpush2.msra.mxu0 0.0
  %1878 = vmatprep.subr.mxu0 0.0
  %1879 = vmatpush2.msra.mxu0 0.0
  %1880 = vmatprep.subr.mxu0 0.0
  %1881 = vmatpush2.msra.mxu0 0.0
  %1882 = vmatprep.subr.mxu0 0.0
  %1883 = vmatpush2.msra.mxu0 0.0
  %1884 = vmatprep.subr.mxu0 0.0
  %1885 = vmatpush2.msra.mxu0 0.0
  %1886 = vmatprep.subr.mxu0 0.0
  %1887 = vmatpush2.msra.mxu0 0.0
  %1888 = vmatprep.subr.mxu0 0.0
  %1889 = vmatpush2.msra.mxu0 0.0
  %1890 = vmatprep.subr.mxu0 0.0
  %1891 = vmatpush2.msra.mxu0 0.0
  %1892 = vmatprep.subr.mxu0 0.0
  %1893 = vmatpush2.msra.mxu0 0.0
  %1894 = vmatprep.subr.mxu0 0.0
  %1895 = vmatpush2.msra.mxu0 0.0
  %1896 = vmatprep.subr.mxu0 0.0
  %1897 = vmatpush2.msra.mxu0 0.0
  %1898 = vmatprep.mubr.f32.mxu0 0.0
  %1899 = vmatmul.mubr.f32.gmra.mxu0 %v1811
  %v1900 = vpop.f32.mrf.mxu0
  %v1901 = vadd.f32 %v1802, %v1900
  %v1902 = vpop.f32.mrf.mxu0
  %1903 = vmatprep.mubr.f32.mxu0 0.0
  %1904 = vmatmul.mubr.f32.gmra.mxu0 %v1814
  %v1905 = vpop.f32.mrf.mxu0
  %v1906 = vadd.f32 %v1803, %v1905
  %v1907 = vpop.f32.mrf.mxu0
  %1908 = vmatprep.mubr.f32.mxu0 0.0
  %1909 = vmatmul.mubr.f32.gmra.mxu0 %v1817
  %v1910 = vpop.f32.mrf.mxu0
  %v1911 = vadd.f32 %v1804, %v1910
  %v1912 = vpop.f32.mrf.mxu0
  %1913 = vmatprep.mubr.f32.mxu0 0.0
  %1914 = vmatmul.mubr.f32.gmra.mxu0 %v1820
  %v1915 = vpop.f32.mrf.mxu0
  %v1916 = vadd.f32 %v1805, %v1915
  %v1917 = vpop.f32.mrf.mxu0
  %1918 = vmatprep.mubr.f32.mxu0 0.0
  %1919 = vmatmul.mubr.f32.gmra.mxu0 %v1823
  %v1920 = vpop.f32.mrf.mxu0
  %v1921 = vadd.f32 %v1806, %v1920
  %v1922 = vpop.f32.mrf.mxu0
  %1923 = vmatprep.mubr.f32.mxu0 0.0
  %1924 = vmatmul.mubr.f32.gmra.mxu0 %v1826
  %v1925 = vpop.f32.mrf.mxu0
  %v1926 = vadd.f32 %v1807, %v1925
  %v1927 = vpop.f32.mrf.mxu0
  %1928 = vmatprep.mubr.f32.mxu0 0.0
  %1929 = vmatmul.mubr.f32.gmra.mxu0 %v1829
  %v1930 = vpop.f32.mrf.mxu0
  %v1931 = vadd.f32 %v1808, %v1930
  %v1932 = vpop.f32.mrf.mxu0
  %1933 = vmatprep.mubr.f32.mxu0 0.0
  %1934 = vmatmul.mubr.f32.gmra.mxu0 %v1832
  %v1935 = vpop.f32.mrf.mxu0
  %v1936 = vadd.f32 %v1809, %v1935
  %v1937 = vpop.f32.mrf.mxu0
  %1938 = vdwg.mxu0
  %v1939 = vsel %vm598, %v1901, -inf
  %1940 = vmax.xlane.f32.xlu0 %v1939
  %v1941 = vpop.xlane.xlu0 %1940
  %v1942 = vsel %vm598, %v1906, -inf
  %1943 = vmax.xlane.f32.xlu0 %v1942
  %v1944 = vpop.xlane.xlu0 %1943
  %v1945 = vsel %vm598, %v1911, -inf
  %1946 = vmax.xlane.f32.xlu0 %v1945
  %v1947 = vpop.xlane.xlu0 %1946
  %v1948 = vsel %vm598, %v1916, -inf
  %1949 = vmax.xlane.f32.xlu0 %v1948
  %v1950 = vpop.xlane.xlu0 %1949
  %v1951 = vsel %vm598, %v1921, -inf
  %1952 = vmax.xlane.f32.xlu0 %v1951
  %v1953 = vpop.xlane.xlu0 %1952
  %v1954 = vsel %vm598, %v1926, -inf
  %1955 = vmax.xlane.f32.xlu0 %v1954
  %v1956 = vpop.xlane.xlu0 %1955
  %v1957 = vsel %vm598, %v1931, -inf
  %1958 = vmax.xlane.f32.xlu0 %v1957
  %v1959 = vpop.xlane.xlu0 %1958
  %v1960 = vsel %vm598, %v1936, -inf
  %1961 = vmax.xlane.f32.xlu0 %v1960
  %v1962 = vpop.xlane.xlu0 %1961
  %v1963 = vsub.f32 %v1901, %v1941
  %v1964 = vsub.f32 %v1906, %v1944
  %v1965 = vsub.f32 %v1911, %v1947
  %v1966 = vsub.f32 %v1916, %v1950
  %v1967 = vsub.f32 %v1921, %v1953
  %v1968 = vsub.f32 %v1926, %v1956
  %v1969 = vsub.f32 %v1931, %v1959
  %v1970 = vsub.f32 %v1936, %v1962
  %v1971 = vmul.f32 %v1963, 1.442695
  %v1972 = vpow.pop %v1971
  %v1973 = vmul.f32 %v1964, 1.442695
  %v1974 = vpow.pop %v1973
  %v1975 = vmul.f32 %v1965, 1.442695
  %v1976 = vpow.pop %v1975
  %v1977 = vmul.f32 %v1966, 1.442695
  %v1978 = vpow.pop %v1977
  %v1979 = vmul.f32 %v1967, 1.442695
  %v1980 = vpow.pop %v1979
  %v1981 = vmul.f32 %v1968, 1.442695
  %v1982 = vpow.pop %v1981
  %v1983 = vmul.f32 %v1969, 1.442695
  %v1984 = vpow.pop %v1983
  %v1985 = vmul.f32 %v1970, 1.442695
  %v1986 = vpow.pop %v1985
  %v1987 = vld [vmem:[%s2 + $0x80] sm:$0xff]
  %v1988 = vld [vmem:[%s2 + $0x88] sm:$0xff]
  %v1989 = vld [vmem:[%s2 + $0x90] sm:$0xff]
  %v1990 = vld [vmem:[%s2 + $0x98] sm:$0xff]
  %v1991 = vld [vmem:[%s2 + $0xa0] sm:$0xff]
  %v1992 = vld [vmem:[%s2 + $0xa8] sm:$0xff]
  %v1993 = vld [vmem:[%s2 + $0xb0] sm:$0xff]
  %v1994 = vld [vmem:[%s2 + $0xb8] sm:$0xff]
  %v1996 = vsel %vm598, %v1972, 0
  %v1999 = vsel %vm598, %v1974, 0
  %v2002 = vsel %vm598, %v1976, 0
  %v2005 = vsel %vm598, %v1978, 0
  %v2008 = vsel %vm598, %v1980, 0
  %v2011 = vsel %vm598, %v1982, 0
  %v2014 = vsel %vm598, %v1984, 0
  %v2017 = vsel %vm598, %v1986, 0
  %2019 = vmatprep.subr.mxu0 0.0
  %2020 = vmatpush1.msra.mxu0 0.0
  %2021 = vmatprep.subr.mxu0 0.0
  %2022 = vmatpush1.msra.mxu0 0.0
  %2023 = vmatprep.subr.mxu0 0.0
  %2024 = vmatpush1.msra.mxu0 0.0
  %2025 = vmatprep.subr.mxu0 0.0
  %2026 = vmatpush1.msra.mxu0 0.0
  %2027 = vmatprep.subr.mxu0 0.0
  %2028 = vmatpush1.msra.mxu0 0.0
  %2029 = vmatprep.subr.mxu0 0.0
  %2030 = vmatpush1.msra.mxu0 0.0
  %2031 = vmatprep.subr.mxu0 0.0
  %2032 = vmatpush1.msra.mxu0 0.0
  %2033 = vmatprep.subr.mxu0 0.0
  %2034 = vmatpush1.msra.mxu0 0.0
  %2035 = vmatprep.subr.mxu0 0.0
  %2036 = vmatpush1.msra.mxu0 %v1994
  %2037 = vmatprep.subr.mxu0 0.0
  %2038 = vmatpush1.msra.mxu0 %v1993
  %2039 = vmatprep.subr.mxu0 0.0
  %2040 = vmatpush1.msra.mxu0 %v1992
  %2041 = vmatprep.subr.mxu0 0.0
  %2042 = vmatpush1.msra.mxu0 %v1991
  %2043 = vmatprep.subr.mxu0 0.0
  %2044 = vmatpush1.msra.mxu0 %v1990
  %2045 = vmatprep.subr.mxu0 0.0
  %2046 = vmatpush1.msra.mxu0 %v1989
  %2047 = vmatprep.subr.mxu0 0.0
  %2048 = vmatpush1.msra.mxu0 %v1988
  %2049 = vmatprep.subr.mxu0 0.0
  %2050 = vmatpush1.msra.mxu0 %v1987
  %2051 = vmatprep.subr.mxu0 0.0
  %2052 = vmatpush2.msra.mxu0 0.0
  %2053 = vmatprep.subr.mxu0 0.0
  %2054 = vmatpush2.msra.mxu0 0.0
  %2055 = vmatprep.subr.mxu0 0.0
  %2056 = vmatpush2.msra.mxu0 0.0
  %2057 = vmatprep.subr.mxu0 0.0
  %2058 = vmatpush2.msra.mxu0 0.0
  %2059 = vmatprep.subr.mxu0 0.0
  %2060 = vmatpush2.msra.mxu0 0.0
  %2061 = vmatprep.subr.mxu0 0.0
  %2062 = vmatpush2.msra.mxu0 0.0
  %2063 = vmatprep.subr.mxu0 0.0
  %2064 = vmatpush2.msra.mxu0 0.0
  %2065 = vmatprep.subr.mxu0 0.0
  %2066 = vmatpush2.msra.mxu0 0.0
  %2067 = vmatprep.subr.mxu0 0.0
  %2068 = vmatpush2.msra.mxu0 0.0
  %2069 = vmatprep.subr.mxu0 0.0
  %2070 = vmatpush2.msra.mxu0 0.0
  %2071 = vmatprep.subr.mxu0 0.0
  %2072 = vmatpush2.msra.mxu0 0.0
  %2073 = vmatprep.subr.mxu0 0.0
  %2074 = vmatpush2.msra.mxu0 0.0
  %2075 = vmatprep.subr.mxu0 0.0
  %2076 = vmatpush2.msra.mxu0 0.0
  %2077 = vmatprep.subr.mxu0 0.0
  %2078 = vmatpush2.msra.mxu0 0.0
  %2079 = vmatprep.subr.mxu0 0.0
  %2080 = vmatpush2.msra.mxu0 0.0
  %2081 = vmatprep.subr.mxu0 0.0
  %2082 = vmatpush2.msra.mxu0 0.0
  %2083 = vmatprep.mubr.f32.mxu0 0.0
  %2084 = vmatmul.mubr.f32.gmra.mxu0 %v1996
  %v2085 = vpop.f32.mrf.mxu0
  %v2086 = vadd.f32 0.0, %v2085
  %v2087 = vpop.f32.mrf.mxu0
  %2088 = vmatprep.mubr.f32.mxu0 0.0
  %2089 = vmatmul.mubr.f32.gmra.mxu0 %v1999
  %v2090 = vpop.f32.mrf.mxu0
  %v2091 = vadd.f32 0.0, %v2090
  %v2092 = vpop.f32.mrf.mxu0
  %2093 = vmatprep.mubr.f32.mxu0 0.0
  %2094 = vmatmul.mubr.f32.gmra.mxu0 %v2002
  %v2095 = vpop.f32.mrf.mxu0
  %v2096 = vadd.f32 0.0, %v2095
  %v2097 = vpop.f32.mrf.mxu0
  %2098 = vmatprep.mubr.f32.mxu0 0.0
  %2099 = vmatmul.mubr.f32.gmra.mxu0 %v2005
  %v2100 = vpop.f32.mrf.mxu0
  %v2101 = vadd.f32 0.0, %v2100
  %v2102 = vpop.f32.mrf.mxu0
  %2103 = vmatprep.mubr.f32.mxu0 0.0
  %2104 = vmatmul.mubr.f32.gmra.mxu0 %v2008
  %v2105 = vpop.f32.mrf.mxu0
  %v2106 = vadd.f32 0.0, %v2105
  %v2107 = vpop.f32.mrf.mxu0
  %2108 = vmatprep.mubr.f32.mxu0 0.0
  %2109 = vmatmul.mubr.f32.gmra.mxu0 %v2011
  %v2110 = vpop.f32.mrf.mxu0
  %v2111 = vadd.f32 0.0, %v2110
  %v2112 = vpop.f32.mrf.mxu0
  %2113 = vmatprep.mubr.f32.mxu0 0.0
  %2114 = vmatmul.mubr.f32.gmra.mxu0 %v2014
  %v2115 = vpop.f32.mrf.mxu0
  %v2116 = vadd.f32 0.0, %v2115
  %v2117 = vpop.f32.mrf.mxu0
  %2118 = vmatprep.mubr.f32.mxu0 0.0
  %2119 = vmatmul.mubr.f32.gmra.mxu0 %v2017
  %v2120 = vpop.f32.mrf.mxu0
  %v2121 = vadd.f32 0.0, %v2120
  %v2122 = vpop.f32.mrf.mxu0
  %2123 = vdwg.mxu0
  %v2124 = vmax.f32 %v2086, 1e-30
  %v2125 = vmax.f32 %v2091, 1e-30
  %v2126 = vmax.f32 %v2096, 1e-30
  %v2127 = vmax.f32 %v2101, 1e-30
  %v2128 = vmax.f32 %v2106, 1e-30
  %v2129 = vmax.f32 %v2111, 1e-30
  %v2130 = vmax.f32 %v2116, 1e-30
  %v2131 = vmax.f32 %v2121, 1e-30
  %v2132 = vrcp.pop %v2124
  %v2133 = vmul.f32 %v1972, %v2132
  %v2134 = vrcp.pop %v2125
  %v2135 = vmul.f32 %v1974, %v2134
  %v2136 = vrcp.pop %v2126
  %v2137 = vmul.f32 %v1976, %v2136
  %v2138 = vrcp.pop %v2127
  %v2139 = vmul.f32 %v1978, %v2138
  %v2140 = vrcp.pop %v2128
  %v2141 = vmul.f32 %v1980, %v2140
  %v2142 = vrcp.pop %v2129
  %v2143 = vmul.f32 %v1982, %v2142
  %v2144 = vrcp.pop %v2130
  %v2145 = vmul.f32 %v1984, %v2144
  %v2146 = vrcp.pop %v2131
  %v2147 = vmul.f32 %v1986, %v2146
  %v2148 = vld [vmem:[%s2 + $0x140] sm:$0xff]
  %v2149 = vld [vmem:[%s2 + $0x148] sm:$0xff]
  %v2150 = vld [vmem:[%s2 + $0x150] sm:$0xff]
  %v2151 = vld [vmem:[%s2 + $0x158] sm:$0xff]
  %v2152 = vld [vmem:[%s2 + $0x160] sm:$0xff]
  %v2153 = vld [vmem:[%s2 + $0x168] sm:$0xff]
  %v2154 = vld [vmem:[%s2 + $0x170] sm:$0xff]
  %v2155 = vld [vmem:[%s2 + $0x178] sm:$0xff]
  %v2156 = vld [vmem:[%s1 + $0x120] sm:$0xff]
  %v2157 = vld [vmem:[%s1 + $0x128] sm:$0xff]
  %v2158 = vld [vmem:[%s1 + $0x130] sm:$0xff]
  %v2159 = vld [vmem:[%s1 + $0x138] sm:$0xff]
  %v2161 = vsel %vm250, %v2148, 0
  %v2164 = vsel %vm250, %v2149, 0
  %v2167 = vsel %vm250, %v2150, 0
  %v2170 = vsel %vm250, %v2151, 0
  %v2173 = vsel %vm250, %v2152, 0
  %v2176 = vsel %vm250, %v2153, 0
  %v2179 = vsel %vm250, %v2154, 0
  %v2182 = vsel %vm250, %v2155, 0
  %2184 = vmatprep.subr.mxu0 0.0
  %2185 = vmatpush1.msra.mxu0 0.0
  %2186 = vmatprep.subr.mxu0 0.0
  %2187 = vmatpush1.msra.mxu0 0.0
  %2188 = vmatprep.subr.mxu0 0.0
  %2189 = vmatpush1.msra.mxu0 0.0
  %2190 = vmatprep.subr.mxu0 0.0
  %2191 = vmatpush1.msra.mxu0 0.0
  %2192 = vmatprep.subr.mxu0 0.0
  %2193 = vmatpush1.msra.mxu0 0.0
  %2194 = vmatprep.subr.mxu0 0.0
  %2195 = vmatpush1.msra.mxu0 0.0
  %2196 = vmatprep.subr.mxu0 0.0
  %2197 = vmatpush1.msra.mxu0 0.0
  %2198 = vmatprep.subr.mxu0 0.0
  %2199 = vmatpush1.msra.mxu0 0.0
  %2200 = vmatprep.subr.mxu0 0.0
  %2201 = vmatpush1.msra.mxu0 0.0
  %2202 = vmatprep.subr.mxu0 0.0
  %2203 = vmatpush1.msra.mxu0 0.0
  %2204 = vmatprep.subr.mxu0 0.0
  %2205 = vmatpush1.msra.mxu0 0.0
  %2206 = vmatprep.subr.mxu0 0.0
  %2207 = vmatpush1.msra.mxu0 0.0
  %2208 = vmatprep.subr.mxu0 0.0
  %2209 = vmatpush1.msra.mxu0 %v2159
  %2210 = vmatprep.subr.mxu0 0.0
  %2211 = vmatpush1.msra.mxu0 %v2158
  %2212 = vmatprep.subr.mxu0 0.0
  %2213 = vmatpush1.msra.mxu0 %v2157
  %2214 = vmatprep.subr.mxu0 0.0
  %2215 = vmatpush1.msra.mxu0 %v2156
  %2216 = vmatprep.subr.mxu0 0.0
  %2217 = vmatpush2.msra.mxu0 0.0
  %2218 = vmatprep.subr.mxu0 0.0
  %2219 = vmatpush2.msra.mxu0 0.0
  %2220 = vmatprep.subr.mxu0 0.0
  %2221 = vmatpush2.msra.mxu0 0.0
  %2222 = vmatprep.subr.mxu0 0.0
  %2223 = vmatpush2.msra.mxu0 0.0
  %2224 = vmatprep.subr.mxu0 0.0
  %2225 = vmatpush2.msra.mxu0 0.0
  %2226 = vmatprep.subr.mxu0 0.0
  %2227 = vmatpush2.msra.mxu0 0.0
  %2228 = vmatprep.subr.mxu0 0.0
  %2229 = vmatpush2.msra.mxu0 0.0
  %2230 = vmatprep.subr.mxu0 0.0
  %2231 = vmatpush2.msra.mxu0 0.0
  %2232 = vmatprep.subr.mxu0 0.0
  %2233 = vmatpush2.msra.mxu0 0.0
  %2234 = vmatprep.subr.mxu0 0.0
  %2235 = vmatpush2.msra.mxu0 0.0
  %2236 = vmatprep.subr.mxu0 0.0
  %2237 = vmatpush2.msra.mxu0 0.0
  %2238 = vmatprep.subr.mxu0 0.0
  %2239 = vmatpush2.msra.mxu0 0.0
  %2240 = vmatprep.subr.mxu0 0.0
  %2241 = vmatpush2.msra.mxu0 0.0
  %2242 = vmatprep.subr.mxu0 0.0
  %2243 = vmatpush2.msra.mxu0 0.0
  %2244 = vmatprep.subr.mxu0 0.0
  %2245 = vmatpush2.msra.mxu0 0.0
  %2246 = vmatprep.subr.mxu0 0.0
  %2247 = vmatpush2.msra.mxu0 0.0
  %2248 = vmatprep.mubr.f32.mxu0 0.0
  %2249 = vmatmul.mubr.f32.gmra.mxu0 %v2161
  %v2250 = vpop.f32.mrf.mxu0
  %v2251 = vadd.f32 0.0, %v2250
  %v2252 = vpop.f32.mrf.mxu0
  %2253 = vmatprep.mubr.f32.mxu0 0.0
  %2254 = vmatmul.mubr.f32.gmra.mxu0 %v2164
  %v2255 = vpop.f32.mrf.mxu0
  %v2256 = vadd.f32 0.0, %v2255
  %v2257 = vpop.f32.mrf.mxu0
  %2258 = vmatprep.mubr.f32.mxu0 0.0
  %2259 = vmatmul.mubr.f32.gmra.mxu0 %v2167
  %v2260 = vpop.f32.mrf.mxu0
  %v2261 = vadd.f32 0.0, %v2260
  %v2262 = vpop.f32.mrf.mxu0
  %2263 = vmatprep.mubr.f32.mxu0 0.0
  %2264 = vmatmul.mubr.f32.gmra.mxu0 %v2170
  %v2265 = vpop.f32.mrf.mxu0
  %v2266 = vadd.f32 0.0, %v2265
  %v2267 = vpop.f32.mrf.mxu0
  %2268 = vmatprep.mubr.f32.mxu0 0.0
  %2269 = vmatmul.mubr.f32.gmra.mxu0 %v2173
  %v2270 = vpop.f32.mrf.mxu0
  %v2271 = vadd.f32 0.0, %v2270
  %v2272 = vpop.f32.mrf.mxu0
  %2273 = vmatprep.mubr.f32.mxu0 0.0
  %2274 = vmatmul.mubr.f32.gmra.mxu0 %v2176
  %v2275 = vpop.f32.mrf.mxu0
  %v2276 = vadd.f32 0.0, %v2275
  %v2277 = vpop.f32.mrf.mxu0
  %2278 = vmatprep.mubr.f32.mxu0 0.0
  %2279 = vmatmul.mubr.f32.gmra.mxu0 %v2179
  %v2280 = vpop.f32.mrf.mxu0
  %v2281 = vadd.f32 0.0, %v2280
  %v2282 = vpop.f32.mrf.mxu0
  %2283 = vmatprep.mubr.f32.mxu0 0.0
  %2284 = vmatmul.mubr.f32.gmra.mxu0 %v2182
  %v2285 = vpop.f32.mrf.mxu0
  %v2286 = vadd.f32 0.0, %v2285
  %v2287 = vpop.f32.mrf.mxu0
  %2288 = vdwg.mxu0
  %v2289 = vld [vmem:[%s2 + $0x180] sm:$0xff]
  %v2290 = vld [vmem:[%s2 + $0x188] sm:$0xff]
  %v2291 = vld [vmem:[%s2 + $0x190] sm:$0xff]
  %v2292 = vld [vmem:[%s2 + $0x198] sm:$0xff]
  %v2293 = vld [vmem:[%s2 + $0x1a0] sm:$0xff]
  %v2294 = vld [vmem:[%s2 + $0x1a8] sm:$0xff]
  %v2295 = vld [vmem:[%s2 + $0x1b0] sm:$0xff]
  %v2296 = vld [vmem:[%s2 + $0x1b8] sm:$0xff]
  %v2297 = vmul.f32 %v2251, %v2289
  %v2298 = vmul.f32 %v2256, %v2290
  %v2299 = vmul.f32 %v2261, %v2291
  %v2300 = vmul.f32 %v2266, %v2292
  %v2301 = vmul.f32 %v2271, %v2293
  %v2302 = vmul.f32 %v2276, %v2294
  %v2303 = vmul.f32 %v2281, %v2295
  %v2304 = vmul.f32 %v2286, %v2296
  %v2306 = vsel %vm598, %v2133, 0
  %v2309 = vsel %vm598, %v2135, 0
  %v2312 = vsel %vm598, %v2137, 0
  %v2315 = vsel %vm598, %v2139, 0
  %v2318 = vsel %vm598, %v2141, 0
  %v2321 = vsel %vm598, %v2143, 0
  %v2324 = vsel %vm598, %v2145, 0
  %v2327 = vsel %vm598, %v2147, 0
  %2329 = vmatprep.subr.mxu0 0.0
  %2330 = vmatpush1.msra.mxu0 0.0
  %2331 = vmatprep.subr.mxu0 0.0
  %2332 = vmatpush1.msra.mxu0 0.0
  %2333 = vmatprep.subr.mxu0 0.0
  %2334 = vmatpush1.msra.mxu0 0.0
  %2335 = vmatprep.subr.mxu0 0.0
  %2336 = vmatpush1.msra.mxu0 0.0
  %2337 = vmatprep.subr.mxu0 0.0
  %2338 = vmatpush1.msra.mxu0 0.0
  %2339 = vmatprep.subr.mxu0 0.0
  %2340 = vmatpush1.msra.mxu0 0.0
  %2341 = vmatprep.subr.mxu0 0.0
  %2342 = vmatpush1.msra.mxu0 0.0
  %2343 = vmatprep.subr.mxu0 0.0
  %2344 = vmatpush1.msra.mxu0 0.0
  %2345 = vmatprep.subr.mxu0 0.0
  %2346 = vmatpush1.msra.mxu0 %v2304
  %2347 = vmatprep.subr.mxu0 0.0
  %2348 = vmatpush1.msra.mxu0 %v2303
  %2349 = vmatprep.subr.mxu0 0.0
  %2350 = vmatpush1.msra.mxu0 %v2302
  %2351 = vmatprep.subr.mxu0 0.0
  %2352 = vmatpush1.msra.mxu0 %v2301
  %2353 = vmatprep.subr.mxu0 0.0
  %2354 = vmatpush1.msra.mxu0 %v2300
  %2355 = vmatprep.subr.mxu0 0.0
  %2356 = vmatpush1.msra.mxu0 %v2299
  %2357 = vmatprep.subr.mxu0 0.0
  %2358 = vmatpush1.msra.mxu0 %v2298
  %2359 = vmatprep.subr.mxu0 0.0
  %2360 = vmatpush1.msra.mxu0 %v2297
  %2361 = vmatprep.subr.mxu0 0.0
  %2362 = vmatpush2.msra.mxu0 0.0
  %2363 = vmatprep.subr.mxu0 0.0
  %2364 = vmatpush2.msra.mxu0 0.0
  %2365 = vmatprep.subr.mxu0 0.0
  %2366 = vmatpush2.msra.mxu0 0.0
  %2367 = vmatprep.subr.mxu0 0.0
  %2368 = vmatpush2.msra.mxu0 0.0
  %2369 = vmatprep.subr.mxu0 0.0
  %2370 = vmatpush2.msra.mxu0 0.0
  %2371 = vmatprep.subr.mxu0 0.0
  %2372 = vmatpush2.msra.mxu0 0.0
  %2373 = vmatprep.subr.mxu0 0.0
  %2374 = vmatpush2.msra.mxu0 0.0
  %2375 = vmatprep.subr.mxu0 0.0
  %2376 = vmatpush2.msra.mxu0 0.0
  %2377 = vmatprep.subr.mxu0 0.0
  %2378 = vmatpush2.msra.mxu0 0.0
  %2379 = vmatprep.subr.mxu0 0.0
  %2380 = vmatpush2.msra.mxu0 0.0
  %2381 = vmatprep.subr.mxu0 0.0
  %2382 = vmatpush2.msra.mxu0 0.0
  %2383 = vmatprep.subr.mxu0 0.0
  %2384 = vmatpush2.msra.mxu0 0.0
  %2385 = vmatprep.subr.mxu0 0.0
  %2386 = vmatpush2.msra.mxu0 0.0
  %2387 = vmatprep.subr.mxu0 0.0
  %2388 = vmatpush2.msra.mxu0 0.0
  %2389 = vmatprep.subr.mxu0 0.0
  %2390 = vmatpush2.msra.mxu0 0.0
  %2391 = vmatprep.subr.mxu0 0.0
  %2392 = vmatpush2.msra.mxu0 0.0
  %2393 = vmatprep.mubr.f32.mxu0 0.0
  %2394 = vmatmul.mubr.f32.gmra.mxu0 %v2306
  %v2395 = vpop.f32.mrf.mxu0
  %v2396 = vadd.f32 0.0, %v2395
  %v2397 = vpop.f32.mrf.mxu0
  %2398 = vmatprep.mubr.f32.mxu0 0.0
  %2399 = vmatmul.mubr.f32.gmra.mxu0 %v2309
  %v2400 = vpop.f32.mrf.mxu0
  %v2401 = vadd.f32 0.0, %v2400
  %v2402 = vpop.f32.mrf.mxu0
  %2403 = vmatprep.mubr.f32.mxu0 0.0
  %2404 = vmatmul.mubr.f32.gmra.mxu0 %v2312
  %v2405 = vpop.f32.mrf.mxu0
  %v2406 = vadd.f32 0.0, %v2405
  %v2407 = vpop.f32.mrf.mxu0
  %2408 = vmatprep.mubr.f32.mxu0 0.0
  %2409 = vmatmul.mubr.f32.gmra.mxu0 %v2315
  %v2410 = vpop.f32.mrf.mxu0
  %v2411 = vadd.f32 0.0, %v2410
  %v2412 = vpop.f32.mrf.mxu0
  %2413 = vmatprep.mubr.f32.mxu0 0.0
  %2414 = vmatmul.mubr.f32.gmra.mxu0 %v2318
  %v2415 = vpop.f32.mrf.mxu0
  %v2416 = vadd.f32 0.0, %v2415
  %v2417 = vpop.f32.mrf.mxu0
  %2418 = vmatprep.mubr.f32.mxu0 0.0
  %2419 = vmatmul.mubr.f32.gmra.mxu0 %v2321
  %v2420 = vpop.f32.mrf.mxu0
  %v2421 = vadd.f32 0.0, %v2420
  %v2422 = vpop.f32.mrf.mxu0
  %2423 = vmatprep.mubr.f32.mxu0 0.0
  %2424 = vmatmul.mubr.f32.gmra.mxu0 %v2324
  %v2425 = vpop.f32.mrf.mxu0
  %v2426 = vadd.f32 0.0, %v2425
  %v2427 = vpop.f32.mrf.mxu0
  %2428 = vmatprep.mubr.f32.mxu0 0.0
  %2429 = vmatmul.mubr.f32.gmra.mxu0 %v2327
  %v2430 = vpop.f32.mrf.mxu0
  %v2431 = vadd.f32 0.0, %v2430
  %v2432 = vpop.f32.mrf.mxu0
  %2433 = vdwg.mxu0
  %v2434 = vld [vmem:[%s1 + $0x140] sm:$0xff]
  %v2435 = vld [vmem:[%s1 + $0x148] sm:$0xff]
  %v2436 = vld [vmem:[%s1 + $0x150] sm:$0xff]
  %v2437 = vld [vmem:[%s1 + $0x158] sm:$0xff]
  %v2439 = vsel %vm250, %v2396, 0
  %v2442 = vsel %vm250, %v2401, 0
  %v2445 = vsel %vm250, %v2406, 0
  %v2448 = vsel %vm250, %v2411, 0
  %v2451 = vsel %vm250, %v2416, 0
  %v2454 = vsel %vm250, %v2421, 0
  %v2457 = vsel %vm250, %v2426, 0
  %v2460 = vsel %vm250, %v2431, 0
  %2462 = vmatprep.subr.mxu0 0.0
  %2463 = vmatpush1.msra.mxu0 0.0
  %2464 = vmatprep.subr.mxu0 0.0
  %2465 = vmatpush1.msra.mxu0 0.0
  %2466 = vmatprep.subr.mxu0 0.0
  %2467 = vmatpush1.msra.mxu0 0.0
  %2468 = vmatprep.subr.mxu0 0.0
  %2469 = vmatpush1.msra.mxu0 0.0
  %2470 = vmatprep.subr.mxu0 0.0
  %2471 = vmatpush1.msra.mxu0 0.0
  %2472 = vmatprep.subr.mxu0 0.0
  %2473 = vmatpush1.msra.mxu0 0.0
  %2474 = vmatprep.subr.mxu0 0.0
  %2475 = vmatpush1.msra.mxu0 0.0
  %2476 = vmatprep.subr.mxu0 0.0
  %2477 = vmatpush1.msra.mxu0 0.0
  %2478 = vmatprep.subr.mxu0 0.0
  %2479 = vmatpush1.msra.mxu0 0.0
  %2480 = vmatprep.subr.mxu0 0.0
  %2481 = vmatpush1.msra.mxu0 0.0
  %2482 = vmatprep.subr.mxu0 0.0
  %2483 = vmatpush1.msra.mxu0 0.0
  %2484 = vmatprep.subr.mxu0 0.0
  %2485 = vmatpush1.msra.mxu0 0.0
  %2486 = vmatprep.subr.mxu0 0.0
  %2487 = vmatpush1.msra.mxu0 %v2437
  %2488 = vmatprep.subr.mxu0 0.0
  %2489 = vmatpush1.msra.mxu0 %v2436
  %2490 = vmatprep.subr.mxu0 0.0
  %2491 = vmatpush1.msra.mxu0 %v2435
  %2492 = vmatprep.subr.mxu0 0.0
  %2493 = vmatpush1.msra.mxu0 %v2434
  %2494 = vmatprep.subr.mxu0 0.0
  %2495 = vmatpush2.msra.mxu0 0.0
  %2496 = vmatprep.subr.mxu0 0.0
  %2497 = vmatpush2.msra.mxu0 0.0
  %2498 = vmatprep.subr.mxu0 0.0
  %2499 = vmatpush2.msra.mxu0 0.0
  %2500 = vmatprep.subr.mxu0 0.0
  %2501 = vmatpush2.msra.mxu0 0.0
  %2502 = vmatprep.subr.mxu0 0.0
  %2503 = vmatpush2.msra.mxu0 0.0
  %2504 = vmatprep.subr.mxu0 0.0
  %2505 = vmatpush2.msra.mxu0 0.0
  %2506 = vmatprep.subr.mxu0 0.0
  %2507 = vmatpush2.msra.mxu0 0.0
  %2508 = vmatprep.subr.mxu0 0.0
  %2509 = vmatpush2.msra.mxu0 0.0
  %2510 = vmatprep.subr.mxu0 0.0
  %2511 = vmatpush2.msra.mxu0 0.0
  %2512 = vmatprep.subr.mxu0 0.0
  %2513 = vmatpush2.msra.mxu0 0.0
  %2514 = vmatprep.subr.mxu0 0.0
  %2515 = vmatpush2.msra.mxu0 0.0
  %2516 = vmatprep.subr.mxu0 0.0
  %2517 = vmatpush2.msra.mxu0 0.0
  %2518 = vmatprep.subr.mxu0 0.0
  %2519 = vmatpush2.msra.mxu0 0.0
  %2520 = vmatprep.subr.mxu0 0.0
  %2521 = vmatpush2.msra.mxu0 0.0
  %2522 = vmatprep.subr.mxu0 0.0
  %2523 = vmatpush2.msra.mxu0 0.0
  %2524 = vmatprep.subr.mxu0 0.0
  %2525 = vmatpush2.msra.mxu0 0.0
  %2526 = vmatprep.mubr.f32.mxu0 0.0
  %2527 = vmatmul.mubr.f32.gmra.mxu0 %v2439
  %v2528 = vpop.f32.mrf.mxu0
  %v2529 = vadd.f32 0.0, %v2528
  %v2530 = vpop.f32.mrf.mxu0
  %2531 = vmatprep.mubr.f32.mxu0 0.0
  %2532 = vmatmul.mubr.f32.gmra.mxu0 %v2442
  %v2533 = vpop.f32.mrf.mxu0
  %v2534 = vadd.f32 0.0, %v2533
  %v2535 = vpop.f32.mrf.mxu0
  %2536 = vmatprep.mubr.f32.mxu0 0.0
  %2537 = vmatmul.mubr.f32.gmra.mxu0 %v2445
  %v2538 = vpop.f32.mrf.mxu0
  %v2539 = vadd.f32 0.0, %v2538
  %v2540 = vpop.f32.mrf.mxu0
  %2541 = vmatprep.mubr.f32.mxu0 0.0
  %2542 = vmatmul.mubr.f32.gmra.mxu0 %v2448
  %v2543 = vpop.f32.mrf.mxu0
  %v2544 = vadd.f32 0.0, %v2543
  %v2545 = vpop.f32.mrf.mxu0
  %2546 = vmatprep.mubr.f32.mxu0 0.0
  %2547 = vmatmul.mubr.f32.gmra.mxu0 %v2451
  %v2548 = vpop.f32.mrf.mxu0
  %v2549 = vadd.f32 0.0, %v2548
  %v2550 = vpop.f32.mrf.mxu0
  %2551 = vmatprep.mubr.f32.mxu0 0.0
  %2552 = vmatmul.mubr.f32.gmra.mxu0 %v2454
  %v2553 = vpop.f32.mrf.mxu0
  %v2554 = vadd.f32 0.0, %v2553
  %v2555 = vpop.f32.mrf.mxu0
  %2556 = vmatprep.mubr.f32.mxu0 0.0
  %2557 = vmatmul.mubr.f32.gmra.mxu0 %v2457
  %v2558 = vpop.f32.mrf.mxu0
  %v2559 = vadd.f32 0.0, %v2558
  %v2560 = vpop.f32.mrf.mxu0
  %2561 = vmatprep.mubr.f32.mxu0 0.0
  %2562 = vmatmul.mubr.f32.gmra.mxu0 %v2460
  %v2563 = vpop.f32.mrf.mxu0
  %v2564 = vadd.f32 0.0, %v2563
  %v2565 = vpop.f32.mrf.mxu0
  %2566 = vdwg.mxu0
  %v2567 = vadd.f32 %v1548, %v2529
  %v2568 = vadd.f32 %v1549, %v2534
  %v2569 = vadd.f32 %v1550, %v2539
  %v2570 = vadd.f32 %v1551, %v2544
  %v2571 = vadd.f32 %v1552, %v2549
  %v2572 = vadd.f32 %v1553, %v2554
  %v2573 = vadd.f32 %v1554, %v2559
  %v2574 = vadd.f32 %v1555, %v2564
  %v2575 = vld [vmem:[%s1 + $0x160] sm:$0xff]
  %v2576 = vld [vmem:[%s1 + $0x168] sm:$0xff]
  %v2577 = vld [vmem:[%s1 + $0x170] sm:$0xff]
  %v2578 = vld [vmem:[%s1 + $0x178] sm:$0xff]
  %v2579 = vld [vmem:[%s1 + $0x180] sm:$0x1]
  %v2580 = vlaneseq
  %v2581 = vshrl.u32 %v2580, 7
  %v2582 = vsub.s32 0, %v2581
  %v2583 = vrot.slane %v2579, %v2582
  %v2585 = vsel %vm250, %v2567, 0
  %v2588 = vsel %vm250, %v2568, 0
  %v2591 = vsel %vm250, %v2569, 0
  %v2594 = vsel %vm250, %v2570, 0
  %v2597 = vsel %vm250, %v2571, 0
  %v2600 = vsel %vm250, %v2572, 0
  %v2603 = vsel %vm250, %v2573, 0
  %v2606 = vsel %vm250, %v2574, 0
  %2608 = vmatprep.subr.mxu0 0.0
  %2609 = vmatpush1.msra.mxu0 0.0
  %2610 = vmatprep.subr.mxu0 0.0
  %2611 = vmatpush1.msra.mxu0 0.0
  %2612 = vmatprep.subr.mxu0 0.0
  %2613 = vmatpush1.msra.mxu0 0.0
  %2614 = vmatprep.subr.mxu0 0.0
  %2615 = vmatpush1.msra.mxu0 0.0
  %2616 = vmatprep.subr.mxu0 0.0
  %2617 = vmatpush1.msra.mxu0 0.0
  %2618 = vmatprep.subr.mxu0 0.0
  %2619 = vmatpush1.msra.mxu0 0.0
  %2620 = vmatprep.subr.mxu0 0.0
  %2621 = vmatpush1.msra.mxu0 0.0
  %2622 = vmatprep.subr.mxu0 0.0
  %2623 = vmatpush1.msra.mxu0 0.0
  %2624 = vmatprep.subr.mxu0 0.0
  %2625 = vmatpush1.msra.mxu0 0.0
  %2626 = vmatprep.subr.mxu0 0.0
  %2627 = vmatpush1.msra.mxu0 0.0
  %2628 = vmatprep.subr.mxu0 0.0
  %2629 = vmatpush1.msra.mxu0 0.0
  %2630 = vmatprep.subr.mxu0 0.0
  %2631 = vmatpush1.msra.mxu0 0.0
  %2632 = vmatprep.subr.mxu0 0.0
  %2633 = vmatpush1.msra.mxu0 %v2578
  %2634 = vmatprep.subr.mxu0 0.0
  %2635 = vmatpush1.msra.mxu0 %v2577
  %2636 = vmatprep.subr.mxu0 0.0
  %2637 = vmatpush1.msra.mxu0 %v2576
  %2638 = vmatprep.subr.mxu0 0.0
  %2639 = vmatpush1.msra.mxu0 %v2575
  %2640 = vmatprep.subr.mxu0 0.0
  %2641 = vmatpush2.msra.mxu0 0.0
  %2642 = vmatprep.subr.mxu0 0.0
  %2643 = vmatpush2.msra.mxu0 0.0
  %2644 = vmatprep.subr.mxu0 0.0
  %2645 = vmatpush2.msra.mxu0 0.0
  %2646 = vmatprep.subr.mxu0 0.0
  %2647 = vmatpush2.msra.mxu0 0.0
  %2648 = vmatprep.subr.mxu0 0.0
  %2649 = vmatpush2.msra.mxu0 0.0
  %2650 = vmatprep.subr.mxu0 0.0
  %2651 = vmatpush2.msra.mxu0 0.0
  %2652 = vmatprep.subr.mxu0 0.0
  %2653 = vmatpush2.msra.mxu0 0.0
  %2654 = vmatprep.subr.mxu0 0.0
  %2655 = vmatpush2.msra.mxu0 0.0
  %2656 = vmatprep.subr.mxu0 0.0
  %2657 = vmatpush2.msra.mxu0 0.0
  %2658 = vmatprep.subr.mxu0 0.0
  %2659 = vmatpush2.msra.mxu0 0.0
  %2660 = vmatprep.subr.mxu0 0.0
  %2661 = vmatpush2.msra.mxu0 0.0
  %2662 = vmatprep.subr.mxu0 0.0
  %2663 = vmatpush2.msra.mxu0 0.0
  %2664 = vmatprep.subr.mxu0 0.0
  %2665 = vmatpush2.msra.mxu0 0.0
  %2666 = vmatprep.subr.mxu0 0.0
  %2667 = vmatpush2.msra.mxu0 0.0
  %2668 = vmatprep.subr.mxu0 0.0
  %2669 = vmatpush2.msra.mxu0 0.0
  %2670 = vmatprep.subr.mxu0 0.0
  %2671 = vmatpush2.msra.mxu0 0.0
  %2672 = vmatprep.mubr.f32.mxu0 0.0
  %2673 = vmatmul.mubr.f32.gmra.mxu0 %v2585
  %v2674 = vpop.f32.mrf.mxu0
  %v2675 = vadd.f32 %v2583, %v2674
  %v2676 = vpop.f32.mrf.mxu0
  %2677 = vmatprep.mubr.f32.mxu0 0.0
  %2678 = vmatmul.mubr.f32.gmra.mxu0 %v2588
  %v2679 = vpop.f32.mrf.mxu0
  %v2680 = vadd.f32 %v2583, %v2679
  %v2681 = vpop.f32.mrf.mxu0
  %2682 = vmatprep.mubr.f32.mxu0 0.0
  %2683 = vmatmul.mubr.f32.gmra.mxu0 %v2591
  %v2684 = vpop.f32.mrf.mxu0
  %v2685 = vadd.f32 %v2583, %v2684
  %v2686 = vpop.f32.mrf.mxu0
  %2687 = vmatprep.mubr.f32.mxu0 0.0
  %2688 = vmatmul.mubr.f32.gmra.mxu0 %v2594
  %v2689 = vpop.f32.mrf.mxu0
  %v2690 = vadd.f32 %v2583, %v2689
  %v2691 = vpop.f32.mrf.mxu0
  %2692 = vmatprep.mubr.f32.mxu0 0.0
  %2693 = vmatmul.mubr.f32.gmra.mxu0 %v2597
  %v2694 = vpop.f32.mrf.mxu0
  %v2695 = vadd.f32 %v2583, %v2694
  %v2696 = vpop.f32.mrf.mxu0
  %2697 = vmatprep.mubr.f32.mxu0 0.0
  %2698 = vmatmul.mubr.f32.gmra.mxu0 %v2600
  %v2699 = vpop.f32.mrf.mxu0
  %v2700 = vadd.f32 %v2583, %v2699
  %v2701 = vpop.f32.mrf.mxu0
  %2702 = vmatprep.mubr.f32.mxu0 0.0
  %2703 = vmatmul.mubr.f32.gmra.mxu0 %v2603
  %v2704 = vpop.f32.mrf.mxu0
  %v2705 = vadd.f32 %v2583, %v2704
  %v2706 = vpop.f32.mrf.mxu0
  %2707 = vmatprep.mubr.f32.mxu0 0.0
  %2708 = vmatmul.mubr.f32.gmra.mxu0 %v2606
  %v2709 = vpop.f32.mrf.mxu0
  %v2710 = vadd.f32 %v2583, %v2709
  %v2711 = vpop.f32.mrf.mxu0
  %2712 = vdwg.mxu0
  %v2713 = vsub.f32 %v2675, %v86
  %v2714 = vsub.f32 %v2680, %v87
  %v2715 = vsub.f32 %v2685, %v88
  %v2716 = vsub.f32 %v2690, %v89
  %v2717 = vsub.f32 %v2695, %v90
  %v2718 = vsub.f32 %v2700, %v91
  %v2719 = vsub.f32 %v2705, %v92
  %v2720 = vsub.f32 %v2710, %v93
  %v2721 = vmul.f32 %v2713, %v2713
  %v2722 = vmul.f32 %v2714, %v2714
  %v2723 = vmul.f32 %v2715, %v2715
  %v2724 = vmul.f32 %v2716, %v2716
  %v2725 = vmul.f32 %v2717, %v2717
  %v2726 = vmul.f32 %v2718, %v2718
  %v2727 = vmul.f32 %v2719, %v2719
  %v2728 = vmul.f32 %v2720, %v2720
  %v2729 = vsel %vm100, %v2721, 0.0
  %v2730 = vsel %vm100, %v2722, 0.0
  %v2731 = vadd.f32 %v2729, %v2730
  %v2732 = vsel %vm100, %v2723, 0.0
  %v2733 = vadd.f32 %v2731, %v2732
  %v2734 = vsel %vm100, %v2724, 0.0
  %v2735 = vadd.f32 %v2733, %v2734
  %v2736 = vsel %vm100, %v2725, 0.0
  %v2737 = vadd.f32 %v2735, %v2736
  %v2738 = vsel %vm100, %v2726, 0.0
  %v2739 = vadd.f32 %v2737, %v2738
  %v2740 = vsel %vm100, %v2727, 0.0
  %v2741 = vadd.f32 %v2739, %v2740
  %v2742 = vsel %vm100, %v2728, 0.0
  %v2743 = vadd.f32 %v2741, %v2742
  %2744 = vadd.xlane.f32.xlu0 %v2743
  %v2745 = vpop.xlane.xlu0 %2744
  %v2746 = vrot.slane %v2745, 4
  %v2747 = vadd.f32 %v2745, %v2746
  %v2748 = vrot.slane %v2747, 2
  %v2749 = vadd.f32 %v2747, %v2748
  %v2750 = vrot.slane %v2749, 1
  %v2751 = vadd.f32 %v2749, %v2750
  %s2752 = vtos %v2751
  %v2753 = vstv %s2752
  %2754 = vst [vmem:[%s3] sm:$0xff] %v2753
  // Predicated region
  $region14: #{audio_diffusion_conditional_forward.3} parent=0 // pred_check
    _
  $region15: #{audio_diffusion_conditional_forward.3} parent=0 // pred_check_branch
    %2756 = sbr.rel (0) target = $region17
  $region16: #{audio_diffusion_conditional_forward.3} parent=0 // pred_region
    _
  $region17: #{audio_diffusion_conditional_forward.3} parent=0 // pred_fallthru
    _
  // Predicated region
  $region18: #{audio_diffusion_conditional_forward.3} parent=0 // pred_check
    _
  $region19: #{audio_diffusion_conditional_forward.3} parent=0 // pred_check_branch
    %2758 = sbr.rel (0) target = $region21
  $region20: #{audio_diffusion_conditional_forward.3} parent=0 // pred_region
    _
  $region21: #{audio_diffusion_conditional_forward.3} parent=0 // pred_fallthru
    _

</llo_original>
